<compile_context>
chip_gen: v6e
topology: v6e:2x2x1
jax: 0.10.0
libtpu: 0.0.40
codegen_flags: <defaults>
</compile_context>

<pallas_src>
import jax
import jax.numpy as jnp
from jax.experimental import pallas as pl
from jax.experimental.pallas import tpu as pltpu


def _fused_kernel(x_ref, w1_ref, r_ref, w2_ref, b2_ref, o_ref):
    # In-kernel f32 -> bf16 cast of the activation (VPU cast is free; MXU has slack).
    x_bf = x_ref[...].astype(jnp.bfloat16)
    # conv2d35 (1x1 conv == channel matmul) on MXU; BN35 scale pre-folded into w1.
    y1 = jnp.dot(w1_ref[...], x_bf, preferred_element_type=jnp.float32)
    # Residual add (x94) in f32.  BN35 bias already folded into b2 (exact algebra).
    y1 = y1 + r_ref[...]
    # conv2d36 (1x1) on MXU; BN36 scale pre-folded into w2.
    y2 = jnp.dot(w2_ref[...], y1.astype(jnp.bfloat16),
                 preferred_element_type=jnp.float32)
    # BN36 bias (with folded W2@b1), store in requested output dtype.
    o_ref[...] = (y2 + b2_ref[...]).astype(o_ref.dtype)


def fused_block(x, w1, r, w2, b2, *, p_blocks=1, out_dtype=jnp.float32):
    """Channel-major fused block.

    x : [Cin, P]    f32  (cast to bf16 inside the kernel)
    w1: [Cmid, Cin] bf16 (BN35 scale folded in)
    r : [Cmid, P]   f32  (residual, stays f32 for the epilogue)
    w2: [Cout, Cmid] bf16 (BN36 scale folded in)
    b2: [Cout, 1]   f32  (BN36 bias + W2_f32 @ b1 folded in)
    -> [Cout, P]    out_dtype

    p_blocks=1: single grid step (best on single-TC v5e/v6e).
    p_blocks>1: split the SPATIAL axis P (padded to a multiple of 128 per block) so
                both v7x TensorCores each do half of BOTH matmuls + half the output
                write; weights/bias stay resident (constant index maps).
    """
    Cin, P = x.shape
    Cmid = w1.shape[0]
    Cout = w2.shape[0]

    if p_blocks == 1:
        pblk, Ppad = P, P
    else:
        pblk = ((-(-P // p_blocks)) + 127) // 128 * 128     # round up to 128 lanes
        Ppad = pblk * p_blocks
        x = jnp.pad(x, ((0, 0), (0, Ppad - P)))
        r = jnp.pad(r, ((0, 0), (0, Ppad - P)))

    flops = 2 * Ppad * Cin * Cmid + 2 * Ppad * Cmid * Cout          # ~77 MFLOP
    bytes_accessed = (x.size * 4 + r.size * 4 + w1.size * 2 + w2.size * 2
                      + b2.size * 4 + Cout * Ppad * jnp.dtype(out_dtype).itemsize)

    out = pl.pallas_call(
        _fused_kernel,
        out_shape=jax.ShapeDtypeStruct((Cout, Ppad), out_dtype),
        grid=(p_blocks,),
        in_specs=[
            pl.BlockSpec((Cin, pblk), lambda i: (0, i)),    # X       (split over P)
            pl.BlockSpec((Cmid, Cin), lambda i: (0, 0)),    # W1*s1   (resident)
            pl.BlockSpec((Cmid, pblk), lambda i: (0, i)),   # residual(split over P)
            pl.BlockSpec((Cout, Cmid), lambda i: (0, 0)),   # W2*s2   (resident)
            pl.BlockSpec((Cout, 1), lambda i: (0, 0)),      # b2'     (resident)
        ],
        out_specs=pl.BlockSpec((Cout, pblk), lambda i: (0, i)),
        compiler_params=pltpu.CompilerParams(
            dimension_semantics=("parallel",)),
        cost_estimate=pl.CostEstimate(
            flops=flops, transcendentals=0, bytes_accessed=bytes_accessed),
    )(x, w1, r, w2, b2)

    return out[:, :P] if Ppad != P else out


def fold_bn(gamma, beta, running_mean, running_var, eps=1e-5):
    scale = gamma / jnp.sqrt(running_var + eps)
    bias = beta - running_mean * scale
    return scale, bias


def make_params(key):
    k = jax.random.split(key, 6)
    Cin, Cmid = 768, 128
    eps = 1e-5
    # Conv2d weights exactly as PyTorch stores them: [Cout, Cin, 1, 1].
    w35 = jax.random.normal(k[0], (Cmid, Cin, 1, 1), jnp.float32) * 0.02   # conv2d35
    w36 = jax.random.normal(k[1], (Cin, Cmid, 1, 1), jnp.float32) * 0.02   # conv2d36
    # BatchNorm affine params + running stats (mean=0, var=1 as at init).
    g35 = 1.0 + 0.1 * jax.random.normal(k[2], (Cmid,), jnp.float32)
    be35 = 0.1 * jax.random.normal(k[3], (Cmid,), jnp.float32)
    g36 = 1.0 + 0.1 * jax.random.normal(k[4], (Cin,), jnp.float32)
    be36 = 0.1 * jax.random.normal(k[5], (Cin,), jnp.float32)
    rm35, rv35 = jnp.zeros((Cmid,), jnp.float32), jnp.ones((Cmid,), jnp.float32)
    rm36, rv36 = jnp.zeros((Cin,), jnp.float32), jnp.ones((Cin,), jnp.float32)

    s1, b1 = fold_bn(g35, be35, rm35, rv35, eps)
    s2, b2 = fold_bn(g36, be36, rm36, rv36, eps)

    # Fold BN scales into conv weights (exact algebra); keep [Cout, Cin] orientation
    # (what channel-major matmul needs -> no weight transposes anywhere).
    w1_f32 = w35[:, :, 0, 0] * s1[:, None]    # [128, 768]
    w2_f32 = w36[:, :, 0, 0] * s2[:, None]    # [768, 128]
    # Fold BN35 bias through conv2d36:  W2 @ (y + b1) + b2 == W2 @ y + (W2 @ b1 + b2).
    b2_folded = b2 + w2_f32 @ b1              # [768], exact f32 algebra

    return {
        "w1": w1_f32.astype(jnp.bfloat16),
        "w2": w2_f32.astype(jnp.bfloat16),
        "b2": b2_folded.reshape(Cin, 1),
        # f32 copies + raw biases kept only for the pure-JAX reference checks below.
        "w1_f32": w1_f32,
        "w2_f32": w2_f32,
        "b1_raw": b1.reshape(Cmid, 1),
        "b2_raw": b2.reshape(Cin, 1),
    }


def model_forward(x100, x94, params, *, p_blocks=1, out_dtype=jnp.float32):
    """x100: NCHW [1,768,H,W] f32, x94: NCHW [1,128,H,W] f32 -> NCHW [1,768,H,W]."""
    N, C1, H, W = x100.shape
    Cmid = x94.shape[1]
    assert N == 1, "channel-major reshape is transpose-free only for N == 1"
    P = N * H * W

    # NCHW with N=1: [1,C,H,W] -> [C, H*W] is a free reshape (no transpose, no copy).
    # No dtype cast here: the f32 -> bf16 cast happens inside the kernel.
    x = x100.reshape(C1, P)
    r = x94.reshape(Cmid, P)

    out = fused_block(x, params["w1"], r, params["w2"], params["b2"],
                      p_blocks=p_blocks, out_dtype=out_dtype)
    return out.reshape(N, C1, H, W)   # free reshape back to NCHW


def reference_forward_bf16(x100, x94, params):
    """Pure-JAX reference with the same bf16 operand casts / f32 epilogue as the kernel."""
    N, C1, H, W = x100.shape
    Cmid = x94.shape[1]
    x = x100.reshape(C1, -1).astype(jnp.bfloat16)
    r = x94.reshape(Cmid, -1)
    y1 = jnp.dot(params["w1"], x, preferred_element_type=jnp.float32) + r
    y2 = jnp.dot(params["w2"], y1.astype(jnp.bfloat16),
                 preferred_element_type=jnp.float32) + params["b2"]
    return y2.reshape(N, C1, H, W)


def reference_forward_f32(x100, x94, params):
    """Full-f32 reference (folded inference BN, un-folded biases) for numerics sanity."""
    N, C1, H, W = x100.shape
    Cmid = x94.shape[1]
    x = x100.reshape(C1, -1)
    r = x94.reshape(Cmid, -1)
    y1 = params["w1_f32"] @ x + params["b1_raw"] + r
    y2 = params["w2_f32"] @ y1 + params["b2_raw"]
    return y2.reshape(N, C1, H, W)


if __name__ == "__main__":
    key = jax.random.PRNGKey(0)
    kx, kr, kp = jax.random.split(key, 3)

    # Shapes implied by the module: 1x768x14x14 and 1x128x14x14.
    x100 = jax.random.normal(kx, (1, 768, 14, 14), jnp.float32)
    x94 = jax.random.normal(kr, (1, 128, 14, 14), jnp.float32)
    params = make_params(kp)

    ref_bf16 = reference_forward_bf16(x100, x94, params)
    ref_f32 = reference_forward_f32(x100, x94, params)

    # Default path: single grid step (best on v5e/v6e single TensorCore).
    fwd = jax.jit(model_forward)
    out = jax.block_until_ready(fwd(x100, x94, params))
    assert out.shape == (1, 768, 14, 14), out.shape
    assert jnp.allclose(out, ref_bf16, atol=5e-3, rtol=5e-3), \
        "mismatch vs bf16-matched JAX reference (p_blocks=1)"
    assert jnp.allclose(out, ref_f32, atol=3e-2, rtol=3e-2), \
        "mismatch vs f32 JAX reference (p_blocks=1)"

    # v7x-style spatial split (P padded 196 -> 256, two lane-dense 128-wide blocks):
    # both TensorCores each do half of BOTH matmuls; weights stay resident.
    fwd2 = jax.jit(lambda a, b, p: model_forward(a, b, p, p_blocks=2))
    out2 = jax.block_until_ready(fwd2(x100, x94, params))
    assert out2.shape == (1, 768, 14, 14), out2.shape
    assert jnp.allclose(out2, ref_bf16, atol=5e-3, rtol=5e-3), \
        "mismatch vs bf16-matched JAX reference (p_blocks=2)"

    print("KERNEL_OK")
</pallas_src>

<mosaic_0001>
module attributes {stable_mosaic.version = 11 : i64} {
  func.func @_fused_kernel(%arg0: i32, %arg1: memref<768x196xf32, #tpu.memory_space<vmem>>, %arg2: memref<128x768xbf16, #tpu.memory_space<vmem>>, %arg3: memref<128x196xf32, #tpu.memory_space<vmem>>, %arg4: memref<768x128xbf16, #tpu.memory_space<vmem>>, %arg5: memref<768x1xf32, #tpu.memory_space<vmem>>, %arg6: memref<768x196xf32, #tpu.memory_space<vmem>>) attributes {dimension_semantics = [#tpu.dimension_semantics<parallel>], iteration_bounds = array<i64: 1>, scalar_prefetch = 0 : i64, scratch_operands = 0 : i64, tpu.core_type = #tpu.core_type<tc>, window_params = [{transform_indices = @transform_0, window_bounds = array<i64: 768, 196>}, {pipeline_mode = #tpu.pipeline_mode<synchronous>, transform_indices = @transform_1, window_bounds = array<i64: 128, 768>}, {transform_indices = @transform_2, window_bounds = array<i64: 128, 196>}, {pipeline_mode = #tpu.pipeline_mode<synchronous>, transform_indices = @transform_3, window_bounds = array<i64: 768, 128>}, {pipeline_mode = #tpu.pipeline_mode<synchronous>, transform_indices = @transform_4, window_bounds = array<i64: 768, 1>}, {transform_indices = @transform_5, window_bounds = array<i64: 768, 196>}]} {
    %c0 = arith.constant 0 : index
    %c0_0 = arith.constant 0 : index
    %0 = vector.load %arg1[%c0, %c0_0] : memref<768x196xf32, #tpu.memory_space<vmem>>, vector<768x196xf32>
    %1 = arith.truncf %0 : vector<768x196xf32> to vector<768x196xbf16>
    %c0_1 = arith.constant 0 : index
    %c0_2 = arith.constant 0 : index
    %2 = vector.load %arg2[%c0_1, %c0_2] : memref<128x768xbf16, #tpu.memory_space<vmem>>, vector<128x768xbf16>
    %cst = arith.constant dense<0.000000e+00> : vector<128x196xf32>
    %3 = tpu.matmul %2, %1, %cst {dimension_numbers = #tpu.dot_dimension_numbers<[1], [0], [0], [1], [0, 0, 1, 1], [], []>} : vector<128x768xbf16>, vector<768x196xbf16>, vector<128x196xf32> -> vector<128x196xf32>
    %c0_3 = arith.constant 0 : index
    %c0_4 = arith.constant 0 : index
    %4 = vector.load %arg3[%c0_3, %c0_4] : memref<128x196xf32, #tpu.memory_space<vmem>>, vector<128x196xf32>
    %5 = arith.addf %3, %4 : vector<128x196xf32>
    %c0_5 = arith.constant 0 : index
    %c0_6 = arith.constant 0 : index
    %6 = vector.load %arg4[%c0_5, %c0_6] : memref<768x128xbf16, #tpu.memory_space<vmem>>, vector<768x128xbf16>
    %7 = arith.truncf %5 : vector<128x196xf32> to vector<128x196xbf16>
    %cst_7 = arith.constant dense<0.000000e+00> : vector<768x196xf32>
    %8 = tpu.matmul %6, %7, %cst_7 {dimension_numbers = #tpu.dot_dimension_numbers<[1], [0], [0], [1], [0, 0, 1, 1], [], []>} : vector<768x128xbf16>, vector<128x196xbf16>, vector<768x196xf32> -> vector<768x196xf32>
    %c0_8 = arith.constant 0 : index
    %c0_9 = arith.constant 0 : index
    %9 = vector.load %arg5[%c0_8, %c0_9] : memref<768x1xf32, #tpu.memory_space<vmem>>, vector<768x1xf32>
    %10 = vector.broadcast %9 : vector<768x1xf32> to vector<768x196xf32>
    %11 = arith.addf %8, %10 : vector<768x196xf32>
    %c0_10 = arith.constant 0 : index
    %c0_11 = arith.constant 0 : index
    %12 = vector.load %arg6[%c0_10, %c0_11] : memref<768x196xf32, #tpu.memory_space<vmem>>, vector<768x196xf32>
    tpu.vector_store %arg6[%c0_10, %c0_11], %11 {strides = array<i32>} : memref<768x196xf32, #tpu.memory_space<vmem>>, vector<768x196xf32>,
    return
  }
  func.func @transform_0(%arg0: i32) -> (i32, i32) {
    %c0_i32 = arith.constant 0 : i32
    %c0_i32_0 = arith.constant 0 : i32
    return %c0_i32, %arg0 : i32, i32
  }
  func.func @transform_1(%arg0: i32) -> (i32, i32) {
    %c0_i32 = arith.constant 0 : i32
    %c0_i32_0 = arith.constant 0 : i32
    %c0_i32_1 = arith.constant 0 : i32
    return %c0_i32, %c0_i32_0 : i32, i32
  }
  func.func @transform_2(%arg0: i32) -> (i32, i32) {
    %c0_i32 = arith.constant 0 : i32
    %c0_i32_0 = arith.constant 0 : i32
    return %c0_i32, %arg0 : i32, i32
  }
  func.func @transform_3(%arg0: i32) -> (i32, i32) {
    %c0_i32 = arith.constant 0 : i32
    %c0_i32_0 = arith.constant 0 : i32
    %c0_i32_1 = arith.constant 0 : i32
    return %c0_i32, %c0_i32_0 : i32, i32
  }
  func.func @transform_4(%arg0: i32) -> (i32, i32) {
    %c0_i32 = arith.constant 0 : i32
    %c0_i32_0 = arith.constant 0 : i32
    %c0_i32_1 = arith.constant 0 : i32
    return %c0_i32, %c0_i32_0 : i32, i32
  }
  func.func @transform_5(%arg0: i32) -> (i32, i32) {
    %c0_i32 = arith.constant 0 : i32
    %c0_i32_0 = arith.constant 0 : i32
    return %c0_i32, %arg0 : i32, i32
  }
}

</mosaic_0001>

<llo_original>
// kernel: model_forward.1
$region0: #{model_forward.1}
  #allocation0 [shape = 'u32[]', space=smem, size = 0x4, offset = 0x4, fixed_abs, tag = 'smem constant byte address 0x4 - core index']
  #allocation1 [shape = 'u32[144,128]{1,0:T(1,128)}', space=vmem, size = 0x12000, scoped, tag = 'internal scratch']
  %s0 = inlined_call_operand.vmem [shape: f32[768,196], index: 0, kind: input, shape index: {}]
  %s1 = inlined_call_operand.vmem [shape: bf16[128,768], index: 1, kind: input, shape index: {}]
  %s2 = inlined_call_operand.vmem [shape: f32[128,196], index: 2, kind: input, shape index: {}]
  %s3 = inlined_call_operand.vmem [shape: bf16[768,128], index: 3, kind: input, shape index: {}]
  %s4 = inlined_call_operand.vmem [shape: f32[768,1], index: 4, kind: input, shape index: {}]
  %s5 = inlined_call_operand.vmem [shape: f32[768,196], index: 5, kind: output, shape index: {}]
  %s6 = sld [smem:[#allocation0]]
  $region30: #{model_forward.1} parent=0
    _
  %s8 = ssub.s32 1, %s6
  %s9 = scalar_select 0, %s8, %s6
  // Predicated region
  $region2: #{model_forward.1} parent=0 // pred_check
    _
  $region3: #{model_forward.1} parent=0 // pred_check_branch
    %11 = sbr.rel (0) target = $region5
  $region4: #{model_forward.1} parent=0 // pred_region
    _
  $region5: #{model_forward.1} parent=0 // pred_fallthru
    _
  // Predicated region
  $region6: #{model_forward.1} parent=0 // pred_check
    _
  $region7: #{model_forward.1} parent=0 // pred_check_branch
    %13 = sbr.rel (0) target = $region9
  $region8: #{model_forward.1} parent=0 // pred_region
    _
  $region9: #{model_forward.1} parent=0 // pred_fallthru
    _
  // Predicated region
  $region10: #{model_forward.1} parent=0 // pred_check
    _
  $region11: #{model_forward.1} parent=0 // pred_check_branch
    %15 = sbr.rel (0) target = $region13
  $region12: #{model_forward.1} parent=0 // pred_region
    _
  $region13: #{model_forward.1} parent=0 // pred_fallthru
    _
  // Predicated region
  $region14: #{model_forward.1} parent=0 // pred_check
    _
  $region15: #{model_forward.1} parent=0 // pred_check_branch
    %17 = sbr.rel (0) target = $region17
  $region16: #{model_forward.1} parent=0 // pred_region
    _
  $region17: #{model_forward.1} parent=0 // pred_fallthru
    _
  // Predicated region
  $region18: #{model_forward.1} parent=0 // pred_check
    _
  $region19: #{model_forward.1} parent=0 // pred_check_branch
    %19 = sbr.rel (0) target = $region21
  $region20: #{model_forward.1} parent=0 // pred_region
    _
  $region21: #{model_forward.1} parent=0 // pred_fallthru
    _
  %v21 = vld [vmem:[%s0] sm:$0xff]
  %v22 = vld [vmem:[%s0 + $0x8] sm:$0xff]
  %v23 = vld [vmem:[%s0 + $0x10] sm:$0xff]
  %v24 = vld [vmem:[%s0 + $0x18] sm:$0xff]
  %v25 = vld [vmem:[%s0 + $0x20] sm:$0xff]
  %v26 = vld [vmem:[%s0 + $0x28] sm:$0xff]
  %v27 = vld [vmem:[%s0 + $0x30] sm:$0xff]
  %v28 = vld [vmem:[%s0 + $0x38] sm:$0xff]
  %v29 = vld [vmem:[%s0 + $0x40] sm:$0xff]
  %v30 = vld [vmem:[%s0 + $0x48] sm:$0xff]
  %v31 = vld [vmem:[%s0 + $0x50] sm:$0xff]
  %v32 = vld [vmem:[%s0 + $0x58] sm:$0xff]
  %v33 = vld [vmem:[%s0 + $0x60] sm:$0xff]
  %v34 = vld [vmem:[%s0 + $0x68] sm:$0xff]
  %v35 = vld [vmem:[%s0 + $0x70] sm:$0xff]
  %v36 = vld [vmem:[%s0 + $0x78] sm:$0xff]
  %v37 = vld [vmem:[%s0 + $0x80] sm:$0xff]
  %v38 = vld [vmem:[%s0 + $0x88] sm:$0xff]
  %v39 = vld [vmem:[%s0 + $0x90] sm:$0xff]
  %v40 = vld [vmem:[%s0 + $0x98] sm:$0xff]
  %v41 = vld [vmem:[%s0 + $0xa0] sm:$0xff]
  %v42 = vld [vmem:[%s0 + $0xa8] sm:$0xff]
  %v43 = vld [vmem:[%s0 + $0xb0] sm:$0xff]
  %v44 = vld [vmem:[%s0 + $0xb8] sm:$0xff]
  %v45 = vld [vmem:[%s0 + $0xc0] sm:$0xff]
  %v46 = vld [vmem:[%s0 + $0xc8] sm:$0xff]
  %v47 = vld [vmem:[%s0 + $0xd0] sm:$0xff]
  %v48 = vld [vmem:[%s0 + $0xd8] sm:$0xff]
  %v49 = vld [vmem:[%s0 + $0xe0] sm:$0xff]
  %v50 = vld [vmem:[%s0 + $0xe8] sm:$0xff]
  %v51 = vld [vmem:[%s0 + $0xf0] sm:$0xff]
  %v52 = vld [vmem:[%s0 + $0xf8] sm:$0xff]
  %v53 = vld [vmem:[%s0 + $0x100] sm:$0xff]
  %v54 = vld [vmem:[%s0 + $0x108] sm:$0xff]
  %v55 = vld [vmem:[%s0 + $0x110] sm:$0xff]
  %v56 = vld [vmem:[%s0 + $0x118] sm:$0xff]
  %v57 = vld [vmem:[%s0 + $0x120] sm:$0xff]
  %v58 = vld [vmem:[%s0 + $0x128] sm:$0xff]
  %v59 = vld [vmem:[%s0 + $0x130] sm:$0xff]
  %v60 = vld [vmem:[%s0 + $0x138] sm:$0xff]
  %v61 = vld [vmem:[%s0 + $0x140] sm:$0xff]
  %v62 = vld [vmem:[%s0 + $0x148] sm:$0xff]
  %v63 = vld [vmem:[%s0 + $0x150] sm:$0xff]
  %v64 = vld [vmem:[%s0 + $0x158] sm:$0xff]
  %v65 = vld [vmem:[%s0 + $0x160] sm:$0xff]
  %v66 = vld [vmem:[%s0 + $0x168] sm:$0xff]
  %v67 = vld [vmem:[%s0 + $0x170] sm:$0xff]
  %v68 = vld [vmem:[%s0 + $0x178] sm:$0xff]
  %v69 = vld [vmem:[%s0 + $0x180] sm:$0xff]
  %v70 = vld [vmem:[%s0 + $0x188] sm:$0xff]
  %v71 = vld [vmem:[%s0 + $0x190] sm:$0xff]
  %v72 = vld [vmem:[%s0 + $0x198] sm:$0xff]
  %v73 = vld [vmem:[%s0 + $0x1a0] sm:$0xff]
  %v74 = vld [vmem:[%s0 + $0x1a8] sm:$0xff]
  %v75 = vld [vmem:[%s0 + $0x1b0] sm:$0xff]
  %v76 = vld [vmem:[%s0 + $0x1b8] sm:$0xff]
  %v77 = vld [vmem:[%s0 + $0x1c0] sm:$0xff]
  %v78 = vld [vmem:[%s0 + $0x1c8] sm:$0xff]
  %v79 = vld [vmem:[%s0 + $0x1d0] sm:$0xff]
  %v80 = vld [vmem:[%s0 + $0x1d8] sm:$0xff]
  %v81 = vld [vmem:[%s0 + $0x1e0] sm:$0xff]
  %v82 = vld [vmem:[%s0 + $0x1e8] sm:$0xff]
  %v83 = vld [vmem:[%s0 + $0x1f0] sm:$0xff]
  %v84 = vld [vmem:[%s0 + $0x1f8] sm:$0xff]
  %v85 = vld [vmem:[%s0 + $0x200] sm:$0xff]
  %v86 = vld [vmem:[%s0 + $0x208] sm:$0xff]
  %v87 = vld [vmem:[%s0 + $0x210] sm:$0xff]
  %v88 = vld [vmem:[%s0 + $0x218] sm:$0xff]
  %v89 = vld [vmem:[%s0 + $0x220] sm:$0xff]
  %v90 = vld [vmem:[%s0 + $0x228] sm:$0xff]
  %v91 = vld [vmem:[%s0 + $0x230] sm:$0xff]
  %v92 = vld [vmem:[%s0 + $0x238] sm:$0xff]
  %v93 = vld [vmem:[%s0 + $0x240] sm:$0xff]
  %v94 = vld [vmem:[%s0 + $0x248] sm:$0xff]
  %v95 = vld [vmem:[%s0 + $0x250] sm:$0xff]
  %v96 = vld [vmem:[%s0 + $0x258] sm:$0xff]
  %v97 = vld [vmem:[%s0 + $0x260] sm:$0xff]
  %v98 = vld [vmem:[%s0 + $0x268] sm:$0xff]
  %v99 = vld [vmem:[%s0 + $0x270] sm:$0xff]
  %v100 = vld [vmem:[%s0 + $0x278] sm:$0xff]
  %v101 = vld [vmem:[%s0 + $0x280] sm:$0xff]
  %v102 = vld [vmem:[%s0 + $0x288] sm:$0xff]
  %v103 = vld [vmem:[%s0 + $0x290] sm:$0xff]
  %v104 = vld [vmem:[%s0 + $0x298] sm:$0xff]
  %v105 = vld [vmem:[%s0 + $0x2a0] sm:$0xff]
  %v106 = vld [vmem:[%s0 + $0x2a8] sm:$0xff]
  %v107 = vld [vmem:[%s0 + $0x2b0] sm:$0xff]
  %v108 = vld [vmem:[%s0 + $0x2b8] sm:$0xff]
  %v109 = vld [vmem:[%s0 + $0x2c0] sm:$0xff]
  %v110 = vld [vmem:[%s0 + $0x2c8] sm:$0xff]
  %v111 = vld [vmem:[%s0 + $0x2d0] sm:$0xff]
  %v112 = vld [vmem:[%s0 + $0x2d8] sm:$0xff]
  %v113 = vld [vmem:[%s0 + $0x2e0] sm:$0xff]
  %v114 = vld [vmem:[%s0 + $0x2e8] sm:$0xff]
  %v115 = vld [vmem:[%s0 + $0x2f0] sm:$0xff]
  %v116 = vld [vmem:[%s0 + $0x2f8] sm:$0xff]
  %v117 = vld [vmem:[%s0 + $0x300] sm:$0xff]
  %v118 = vld [vmem:[%s0 + $0x308] sm:$0xff]
  %v119 = vld [vmem:[%s0 + $0x310] sm:$0xff]
  %v120 = vld [vmem:[%s0 + $0x318] sm:$0xff]
  %v121 = vld [vmem:[%s0 + $0x320] sm:$0xff]
  %v122 = vld [vmem:[%s0 + $0x328] sm:$0xff]
  %v123 = vld [vmem:[%s0 + $0x330] sm:$0xff]
  %v124 = vld [vmem:[%s0 + $0x338] sm:$0xff]
  %v125 = vld [vmem:[%s0 + $0x340] sm:$0xff]
  %v126 = vld [vmem:[%s0 + $0x348] sm:$0xff]
  %v127 = vld [vmem:[%s0 + $0x350] sm:$0xff]
  %v128 = vld [vmem:[%s0 + $0x358] sm:$0xff]
  %v129 = vld [vmem:[%s0 + $0x360] sm:$0xff]
  %v130 = vld [vmem:[%s0 + $0x368] sm:$0xff]
  %v131 = vld [vmem:[%s0 + $0x370] sm:$0xff]
  %v132 = vld [vmem:[%s0 + $0x378] sm:$0xff]
  %v133 = vld [vmem:[%s0 + $0x380] sm:$0xff]
  %v134 = vld [vmem:[%s0 + $0x388] sm:$0xff]
  %v135 = vld [vmem:[%s0 + $0x390] sm:$0xff]
  %v136 = vld [vmem:[%s0 + $0x398] sm:$0xff]
  %v137 = vld [vmem:[%s0 + $0x3a0] sm:$0xff]
  %v138 = vld [vmem:[%s0 + $0x3a8] sm:$0xff]
  %v139 = vld [vmem:[%s0 + $0x3b0] sm:$0xff]
  %v140 = vld [vmem:[%s0 + $0x3b8] sm:$0xff]
  %v141 = vld [vmem:[%s0 + $0x3c0] sm:$0xff]
  %v142 = vld [vmem:[%s0 + $0x3c8] sm:$0xff]
  %v143 = vld [vmem:[%s0 + $0x3d0] sm:$0xff]
  %v144 = vld [vmem:[%s0 + $0x3d8] sm:$0xff]
  %v145 = vld [vmem:[%s0 + $0x3e0] sm:$0xff]
  %v146 = vld [vmem:[%s0 + $0x3e8] sm:$0xff]
  %v147 = vld [vmem:[%s0 + $0x3f0] sm:$0xff]
  %v148 = vld [vmem:[%s0 + $0x3f8] sm:$0xff]
  %v149 = vld [vmem:[%s0 + $0x400] sm:$0xff]
  %v150 = vld [vmem:[%s0 + $0x408] sm:$0xff]
  %v151 = vld [vmem:[%s0 + $0x410] sm:$0xff]
  %v152 = vld [vmem:[%s0 + $0x418] sm:$0xff]
  %v153 = vld [vmem:[%s0 + $0x420] sm:$0xff]
  %v154 = vld [vmem:[%s0 + $0x428] sm:$0xff]
  %v155 = vld [vmem:[%s0 + $0x430] sm:$0xff]
  %v156 = vld [vmem:[%s0 + $0x438] sm:$0xff]
  %v157 = vld [vmem:[%s0 + $0x440] sm:$0xff]
  %v158 = vld [vmem:[%s0 + $0x448] sm:$0xff]
  %v159 = vld [vmem:[%s0 + $0x450] sm:$0xff]
  %v160 = vld [vmem:[%s0 + $0x458] sm:$0xff]
  %v161 = vld [vmem:[%s0 + $0x460] sm:$0xff]
  %v162 = vld [vmem:[%s0 + $0x468] sm:$0xff]
  %v163 = vld [vmem:[%s0 + $0x470] sm:$0xff]
  %v164 = vld [vmem:[%s0 + $0x478] sm:$0xff]
  %v165 = vld [vmem:[%s0 + $0x480] sm:$0xff]
  %v166 = vld [vmem:[%s0 + $0x488] sm:$0xff]
  %v167 = vld [vmem:[%s0 + $0x490] sm:$0xff]
  %v168 = vld [vmem:[%s0 + $0x498] sm:$0xff]
  %v169 = vld [vmem:[%s0 + $0x4a0] sm:$0xff]
  %v170 = vld [vmem:[%s0 + $0x4a8] sm:$0xff]
  %v171 = vld [vmem:[%s0 + $0x4b0] sm:$0xff]
  %v172 = vld [vmem:[%s0 + $0x4b8] sm:$0xff]
  %v173 = vld [vmem:[%s0 + $0x4c0] sm:$0xff]
  %v174 = vld [vmem:[%s0 + $0x4c8] sm:$0xff]
  %v175 = vld [vmem:[%s0 + $0x4d0] sm:$0xff]
  %v176 = vld [vmem:[%s0 + $0x4d8] sm:$0xff]
  %v177 = vld [vmem:[%s0 + $0x4e0] sm:$0xff]
  %v178 = vld [vmem:[%s0 + $0x4e8] sm:$0xff]
  %v179 = vld [vmem:[%s0 + $0x4f0] sm:$0xff]
  %v180 = vld [vmem:[%s0 + $0x4f8] sm:$0xff]
  %v181 = vld [vmem:[%s0 + $0x500] sm:$0xff]
  %v182 = vld [vmem:[%s0 + $0x508] sm:$0xff]
  %v183 = vld [vmem:[%s0 + $0x510] sm:$0xff]
  %v184 = vld [vmem:[%s0 + $0x518] sm:$0xff]
  %v185 = vld [vmem:[%s0 + $0x520] sm:$0xff]
  %v186 = vld [vmem:[%s0 + $0x528] sm:$0xff]
  %v187 = vld [vmem:[%s0 + $0x530] sm:$0xff]
  %v188 = vld [vmem:[%s0 + $0x538] sm:$0xff]
  %v189 = vld [vmem:[%s0 + $0x540] sm:$0xff]
  %v190 = vld [vmem:[%s0 + $0x548] sm:$0xff]
  %v191 = vld [vmem:[%s0 + $0x550] sm:$0xff]
  %v192 = vld [vmem:[%s0 + $0x558] sm:$0xff]
  %v193 = vld [vmem:[%s0 + $0x560] sm:$0xff]
  %v194 = vld [vmem:[%s0 + $0x568] sm:$0xff]
  %v195 = vld [vmem:[%s0 + $0x570] sm:$0xff]
  %v196 = vld [vmem:[%s0 + $0x578] sm:$0xff]
  %v197 = vld [vmem:[%s0 + $0x580] sm:$0xff]
  %v198 = vld [vmem:[%s0 + $0x588] sm:$0xff]
  %v199 = vld [vmem:[%s0 + $0x590] sm:$0xff]
  %v200 = vld [vmem:[%s0 + $0x598] sm:$0xff]
  %v201 = vld [vmem:[%s0 + $0x5a0] sm:$0xff]
  %v202 = vld [vmem:[%s0 + $0x5a8] sm:$0xff]
  %v203 = vld [vmem:[%s0 + $0x5b0] sm:$0xff]
  %v204 = vld [vmem:[%s0 + $0x5b8] sm:$0xff]
  %v205 = vld [vmem:[%s0 + $0x5c0] sm:$0xff]
  %v206 = vld [vmem:[%s0 + $0x5c8] sm:$0xff]
  %v207 = vld [vmem:[%s0 + $0x5d0] sm:$0xff]
  %v208 = vld [vmem:[%s0 + $0x5d8] sm:$0xff]
  %v209 = vld [vmem:[%s0 + $0x5e0] sm:$0xff]
  %v210 = vld [vmem:[%s0 + $0x5e8] sm:$0xff]
  %v211 = vld [vmem:[%s0 + $0x5f0] sm:$0xff]
  %v212 = vld [vmem:[%s0 + $0x5f8] sm:$0xff]
  %v213 = vpack.c.bf16 %v23, %v21
  %v214 = vpack.c.bf16 %v24, %v22
  %v215 = vpack.c.bf16 %v27, %v25
  %v216 = vpack.c.bf16 %v28, %v26
  %v217 = vpack.c.bf16 %v31, %v29
  %v218 = vpack.c.bf16 %v32, %v30
  %v219 = vpack.c.bf16 %v35, %v33
  %v220 = vpack.c.bf16 %v36, %v34
  %v221 = vpack.c.bf16 %v39, %v37
  %v222 = vpack.c.bf16 %v40, %v38
  %v223 = vpack.c.bf16 %v43, %v41
  %v224 = vpack.c.bf16 %v44, %v42
  %v225 = vpack.c.bf16 %v47, %v45
  %v226 = vpack.c.bf16 %v48, %v46
  %v227 = vpack.c.bf16 %v51, %v49
  %v228 = vpack.c.bf16 %v52, %v50
  %v229 = vpack.c.bf16 %v55, %v53
  %v230 = vpack.c.bf16 %v56, %v54
  %v231 = vpack.c.bf16 %v59, %v57
  %v232 = vpack.c.bf16 %v60, %v58
  %v233 = vpack.c.bf16 %v63, %v61
  %v234 = vpack.c.bf16 %v64, %v62
  %v235 = vpack.c.bf16 %v67, %v65
  %v236 = vpack.c.bf16 %v68, %v66
  %v237 = vpack.c.bf16 %v71, %v69
  %v238 = vpack.c.bf16 %v72, %v70
  %v239 = vpack.c.bf16 %v75, %v73
  %v240 = vpack.c.bf16 %v76, %v74
  %v241 = vpack.c.bf16 %v79, %v77
  %v242 = vpack.c.bf16 %v80, %v78
  %v243 = vpack.c.bf16 %v83, %v81
  %v244 = vpack.c.bf16 %v84, %v82
  %v245 = vpack.c.bf16 %v87, %v85
  %v246 = vpack.c.bf16 %v88, %v86
  %v247 = vpack.c.bf16 %v91, %v89
  %v248 = vpack.c.bf16 %v92, %v90
  %v249 = vpack.c.bf16 %v95, %v93
  %v250 = vpack.c.bf16 %v96, %v94
  %v251 = vpack.c.bf16 %v99, %v97
  %v252 = vpack.c.bf16 %v100, %v98
  %v253 = vpack.c.bf16 %v103, %v101
  %v254 = vpack.c.bf16 %v104, %v102
  %v255 = vpack.c.bf16 %v107, %v105
  %v256 = vpack.c.bf16 %v108, %v106
  %v257 = vpack.c.bf16 %v111, %v109
  %v258 = vpack.c.bf16 %v112, %v110
  %v259 = vpack.c.bf16 %v115, %v113
  %v260 = vpack.c.bf16 %v116, %v114
  %v261 = vpack.c.bf16 %v119, %v117
  %v262 = vpack.c.bf16 %v120, %v118
  %v263 = vpack.c.bf16 %v123, %v121
  %v264 = vpack.c.bf16 %v124, %v122
  %v265 = vpack.c.bf16 %v127, %v125
  %v266 = vpack.c.bf16 %v128, %v126
  %v267 = vpack.c.bf16 %v131, %v129
  %v268 = vpack.c.bf16 %v132, %v130
  %v269 = vpack.c.bf16 %v135, %v133
  %v270 = vpack.c.bf16 %v136, %v134
  %v271 = vpack.c.bf16 %v139, %v137
  %v272 = vpack.c.bf16 %v140, %v138
  %v273 = vpack.c.bf16 %v143, %v141
  %v274 = vpack.c.bf16 %v144, %v142
  %v275 = vpack.c.bf16 %v147, %v145
  %v276 = vpack.c.bf16 %v148, %v146
  %v277 = vpack.c.bf16 %v151, %v149
  %v278 = vpack.c.bf16 %v152, %v150
  %v279 = vpack.c.bf16 %v155, %v153
  %v280 = vpack.c.bf16 %v156, %v154
  %v281 = vpack.c.bf16 %v159, %v157
  %v282 = vpack.c.bf16 %v160, %v158
  %v283 = vpack.c.bf16 %v163, %v161
  %v284 = vpack.c.bf16 %v164, %v162
  %v285 = vpack.c.bf16 %v167, %v165
  %v286 = vpack.c.bf16 %v168, %v166
  %v287 = vpack.c.bf16 %v171, %v169
  %v288 = vpack.c.bf16 %v172, %v170
  %v289 = vpack.c.bf16 %v175, %v173
  %v290 = vpack.c.bf16 %v176, %v174
  %v291 = vpack.c.bf16 %v179, %v177
  %v292 = vpack.c.bf16 %v180, %v178
  %v293 = vpack.c.bf16 %v183, %v181
  %v294 = vpack.c.bf16 %v184, %v182
  %v295 = vpack.c.bf16 %v187, %v185
  %v296 = vpack.c.bf16 %v188, %v186
  %v297 = vpack.c.bf16 %v191, %v189
  %v298 = vpack.c.bf16 %v192, %v190
  %v299 = vpack.c.bf16 %v195, %v193
  %v300 = vpack.c.bf16 %v196, %v194
  %v301 = vpack.c.bf16 %v199, %v197
  %v302 = vpack.c.bf16 %v200, %v198
  %v303 = vpack.c.bf16 %v203, %v201
  %v304 = vpack.c.bf16 %v204, %v202
  %v305 = vpack.c.bf16 %v207, %v205
  %v306 = vpack.c.bf16 %v208, %v206
  %v307 = vpack.c.bf16 %v211, %v209
  %v308 = vpack.c.bf16 %v212, %v210
  %v309 = vld [vmem:[%s1] sm:$0xff]
  %v310 = vld [vmem:[%s1 + $0x8] sm:$0xff]
  %v311 = vld [vmem:[%s1 + $0x10] sm:$0xff]
  %v312 = vld [vmem:[%s1 + $0x18] sm:$0xff]
  %v313 = vld [vmem:[%s1 + $0x20] sm:$0xff]
  %v314 = vld [vmem:[%s1 + $0x28] sm:$0xff]
  %v315 = vld [vmem:[%s1 + $0x30] sm:$0xff]
  %v316 = vld [vmem:[%s1 + $0x38] sm:$0xff]
  %v317 = vld [vmem:[%s1 + $0x40] sm:$0xff]
  %v318 = vld [vmem:[%s1 + $0x48] sm:$0xff]
  %v319 = vld [vmem:[%s1 + $0x50] sm:$0xff]
  %v320 = vld [vmem:[%s1 + $0x58] sm:$0xff]
  %v321 = vld [vmem:[%s1 + $0x60] sm:$0xff]
  %v322 = vld [vmem:[%s1 + $0x68] sm:$0xff]
  %v323 = vld [vmem:[%s1 + $0x70] sm:$0xff]
  %v324 = vld [vmem:[%s1 + $0x78] sm:$0xff]
  %v325 = vld [vmem:[%s1 + $0x80] sm:$0xff]
  %v326 = vld [vmem:[%s1 + $0x88] sm:$0xff]
  %v327 = vld [vmem:[%s1 + $0x90] sm:$0xff]
  %v328 = vld [vmem:[%s1 + $0x98] sm:$0xff]
  %v329 = vld [vmem:[%s1 + $0xa0] sm:$0xff]
  %v330 = vld [vmem:[%s1 + $0xa8] sm:$0xff]
  %v331 = vld [vmem:[%s1 + $0xb0] sm:$0xff]
  %v332 = vld [vmem:[%s1 + $0xb8] sm:$0xff]
  %v333 = vld [vmem:[%s1 + $0xc0] sm:$0xff]
  %v334 = vld [vmem:[%s1 + $0xc8] sm:$0xff]
  %v335 = vld [vmem:[%s1 + $0xd0] sm:$0xff]
  %v336 = vld [vmem:[%s1 + $0xd8] sm:$0xff]
  %v337 = vld [vmem:[%s1 + $0xe0] sm:$0xff]
  %v338 = vld [vmem:[%s1 + $0xe8] sm:$0xff]
  %v339 = vld [vmem:[%s1 + $0xf0] sm:$0xff]
  %v340 = vld [vmem:[%s1 + $0xf8] sm:$0xff]
  %v341 = vld [vmem:[%s1 + $0x100] sm:$0xff]
  %v342 = vld [vmem:[%s1 + $0x108] sm:$0xff]
  %v343 = vld [vmem:[%s1 + $0x110] sm:$0xff]
  %v344 = vld [vmem:[%s1 + $0x118] sm:$0xff]
  %v345 = vld [vmem:[%s1 + $0x120] sm:$0xff]
  %v346 = vld [vmem:[%s1 + $0x128] sm:$0xff]
  %v347 = vld [vmem:[%s1 + $0x130] sm:$0xff]
  %v348 = vld [vmem:[%s1 + $0x138] sm:$0xff]
  %v349 = vld [vmem:[%s1 + $0x140] sm:$0xff]
  %v350 = vld [vmem:[%s1 + $0x148] sm:$0xff]
  %v351 = vld [vmem:[%s1 + $0x150] sm:$0xff]
  %v352 = vld [vmem:[%s1 + $0x158] sm:$0xff]
  %v353 = vld [vmem:[%s1 + $0x160] sm:$0xff]
  %v354 = vld [vmem:[%s1 + $0x168] sm:$0xff]
  %v355 = vld [vmem:[%s1 + $0x170] sm:$0xff]
  %v356 = vld [vmem:[%s1 + $0x178] sm:$0xff]
  %v357 = vld [vmem:[%s2] sm:$0xff]
  %v358 = vld [vmem:[%s2 + $0x8] sm:$0xff]
  %v359 = vld [vmem:[%s2 + $0x10] sm:$0xff]
  %v360 = vld [vmem:[%s2 + $0x18] sm:$0xff]
  %v361 = vld [vmem:[%s2 + $0x20] sm:$0xff]
  %v362 = vld [vmem:[%s2 + $0x28] sm:$0xff]
  %v363 = vld [vmem:[%s2 + $0x30] sm:$0xff]
  %v364 = vld [vmem:[%s2 + $0x38] sm:$0xff]
  %v365 = vld [vmem:[%s2 + $0x40] sm:$0xff]
  %v366 = vld [vmem:[%s2 + $0x48] sm:$0xff]
  %v367 = vld [vmem:[%s2 + $0x50] sm:$0xff]
  %v368 = vld [vmem:[%s2 + $0x58] sm:$0xff]
  %v369 = vld [vmem:[%s2 + $0x60] sm:$0xff]
  %v370 = vld [vmem:[%s2 + $0x68] sm:$0xff]
  %v371 = vld [vmem:[%s2 + $0x70] sm:$0xff]
  %v372 = vld [vmem:[%s2 + $0x78] sm:$0xff]
  %v373 = vld [vmem:[%s2 + $0x80] sm:$0xff]
  %v374 = vld [vmem:[%s2 + $0x88] sm:$0xff]
  %v375 = vld [vmem:[%s2 + $0x90] sm:$0xff]
  %v376 = vld [vmem:[%s2 + $0x98] sm:$0xff]
  %v377 = vld [vmem:[%s2 + $0xa0] sm:$0xff]
  %v378 = vld [vmem:[%s2 + $0xa8] sm:$0xff]
  %v379 = vld [vmem:[%s2 + $0xb0] sm:$0xff]
  %v380 = vld [vmem:[%s2 + $0xb8] sm:$0xff]
  %v381 = vld [vmem:[%s2 + $0xc0] sm:$0xff]
  %v382 = vld [vmem:[%s2 + $0xc8] sm:$0xff]
  %v383 = vld [vmem:[%s2 + $0xd0] sm:$0xff]
  %v384 = vld [vmem:[%s2 + $0xd8] sm:$0xff]
  %v385 = vld [vmem:[%s2 + $0xe0] sm:$0xff]
  %v386 = vld [vmem:[%s2 + $0xe8] sm:$0xff]
  %v387 = vld [vmem:[%s2 + $0xf0] sm:$0xff]
  %v388 = vld [vmem:[%s2 + $0xf8] sm:$0xff]
  %v437 = vunpack.c.l.b16 %v309
  %v438 = vunpack.c.h.b16 %v309
  %v439 = vunpack.c.l.b16 %v310
  %v440 = vunpack.c.h.b16 %v310
  %v441 = vunpack.c.l.b16 %v311
  %v442 = vunpack.c.h.b16 %v311
  %v443 = vunpack.c.l.b16 %v312
  %v444 = vunpack.c.h.b16 %v312
  %v445 = vunpack.c.l.b16 %v313
  %v446 = vunpack.c.h.b16 %v313
  %v447 = vunpack.c.l.b16 %v314
  %v448 = vunpack.c.h.b16 %v314
  %v449 = vunpack.c.l.b16 %v315
  %v450 = vunpack.c.h.b16 %v315
  %v451 = vunpack.c.l.b16 %v316
  %v452 = vunpack.c.h.b16 %v316
  %v453 = vunpack.c.l.b16 %v317
  %v454 = vunpack.c.h.b16 %v317
  %v455 = vunpack.c.l.b16 %v318
  %v456 = vunpack.c.h.b16 %v318
  %v457 = vunpack.c.l.b16 %v319
  %v458 = vunpack.c.h.b16 %v319
  %v459 = vunpack.c.l.b16 %v320
  %v460 = vunpack.c.h.b16 %v320
  %v461 = vunpack.c.l.b16 %v321
  %v462 = vunpack.c.h.b16 %v321
  %v463 = vunpack.c.l.b16 %v322
  %v464 = vunpack.c.h.b16 %v322
  %v465 = vunpack.c.l.b16 %v323
  %v466 = vunpack.c.h.b16 %v323
  %v467 = vunpack.c.l.b16 %v324
  %v468 = vunpack.c.h.b16 %v324
  %v469 = vunpack.c.l.b16 %v325
  %v470 = vunpack.c.h.b16 %v325
  %v471 = vunpack.c.l.b16 %v326
  %v472 = vunpack.c.h.b16 %v326
  %v473 = vunpack.c.l.b16 %v327
  %v474 = vunpack.c.h.b16 %v327
  %v475 = vunpack.c.l.b16 %v328
  %v476 = vunpack.c.h.b16 %v328
  %v477 = vunpack.c.l.b16 %v329
  %v478 = vunpack.c.h.b16 %v329
  %v479 = vunpack.c.l.b16 %v330
  %v480 = vunpack.c.h.b16 %v330
  %v481 = vunpack.c.l.b16 %v331
  %v482 = vunpack.c.h.b16 %v331
  %v483 = vunpack.c.l.b16 %v332
  %v484 = vunpack.c.h.b16 %v332
  %v485 = vunpack.c.l.b16 %v333
  %v486 = vunpack.c.h.b16 %v333
  %v487 = vunpack.c.l.b16 %v334
  %v488 = vunpack.c.h.b16 %v334
  %v489 = vunpack.c.l.b16 %v335
  %v490 = vunpack.c.h.b16 %v335
  %v491 = vunpack.c.l.b16 %v336
  %v492 = vunpack.c.h.b16 %v336
  %v493 = vunpack.c.l.b16 %v337
  %v494 = vunpack.c.h.b16 %v337
  %v495 = vunpack.c.l.b16 %v338
  %v496 = vunpack.c.h.b16 %v338
  %v497 = vunpack.c.l.b16 %v339
  %v498 = vunpack.c.h.b16 %v339
  %v499 = vunpack.c.l.b16 %v340
  %v500 = vunpack.c.h.b16 %v340
  %v501 = vunpack.c.l.b16 %v341
  %v502 = vunpack.c.h.b16 %v341
  %v503 = vunpack.c.l.b16 %v342
  %v504 = vunpack.c.h.b16 %v342
  %v505 = vunpack.c.l.b16 %v343
  %v506 = vunpack.c.h.b16 %v343
  %v507 = vunpack.c.l.b16 %v344
  %v508 = vunpack.c.h.b16 %v344
  %v509 = vunpack.c.l.b16 %v345
  %v510 = vunpack.c.h.b16 %v345
  %v511 = vunpack.c.l.b16 %v346
  %v512 = vunpack.c.h.b16 %v346
  %v513 = vunpack.c.l.b16 %v347
  %v514 = vunpack.c.h.b16 %v347
  %v515 = vunpack.c.l.b16 %v348
  %v516 = vunpack.c.h.b16 %v348
  %v517 = vunpack.c.l.b16 %v349
  %v518 = vunpack.c.h.b16 %v349
  %v519 = vunpack.c.l.b16 %v350
  %v520 = vunpack.c.h.b16 %v350
  %v521 = vunpack.c.l.b16 %v351
  %v522 = vunpack.c.h.b16 %v351
  %v523 = vunpack.c.l.b16 %v352
  %v524 = vunpack.c.h.b16 %v352
  %v525 = vunpack.c.l.b16 %v353
  %v526 = vunpack.c.h.b16 %v353
  %v527 = vunpack.c.l.b16 %v354
  %v528 = vunpack.c.h.b16 %v354
  %v529 = vunpack.c.l.b16 %v355
  %v530 = vunpack.c.h.b16 %v355
  %v531 = vunpack.c.l.b16 %v356
  %v532 = vunpack.c.h.b16 %v356
  %v533 = vpack.c.b16 %v443, %v437
  %v534 = vpack.c.b16 %v444, %v438
  %v535 = vpack.c.b16 %v445, %v439
  %v536 = vpack.c.b16 %v446, %v440
  %v537 = vpack.c.b16 %v447, %v441
  %v538 = vpack.c.b16 %v448, %v442
  %v539 = vpack.c.b16 %v455, %v449
  %v540 = vpack.c.b16 %v456, %v450
  %v541 = vpack.c.b16 %v457, %v451
  %v542 = vpack.c.b16 %v458, %v452
  %v543 = vpack.c.b16 %v459, %v453
  %v544 = vpack.c.b16 %v460, %v454
  %v545 = vpack.c.b16 %v467, %v461
  %v546 = vpack.c.b16 %v468, %v462
  %v547 = vpack.c.b16 %v469, %v463
  %v548 = vpack.c.b16 %v470, %v464
  %v549 = vpack.c.b16 %v471, %v465
  %v550 = vpack.c.b16 %v472, %v466
  %v551 = vpack.c.b16 %v479, %v473
  %v552 = vpack.c.b16 %v480, %v474
  %v553 = vpack.c.b16 %v481, %v475
  %v554 = vpack.c.b16 %v482, %v476
  %v555 = vpack.c.b16 %v483, %v477
  %v556 = vpack.c.b16 %v484, %v478
  %v557 = vpack.c.b16 %v491, %v485
  %v558 = vpack.c.b16 %v492, %v486
  %v559 = vpack.c.b16 %v493, %v487
  %v560 = vpack.c.b16 %v494, %v488
  %v561 = vpack.c.b16 %v495, %v489
  %v562 = vpack.c.b16 %v496, %v490
  %v563 = vpack.c.b16 %v503, %v497
  %v564 = vpack.c.b16 %v504, %v498
  %v565 = vpack.c.b16 %v505, %v499
  %v566 = vpack.c.b16 %v506, %v500
  %v567 = vpack.c.b16 %v507, %v501
  %v568 = vpack.c.b16 %v508, %v502
  %v569 = vpack.c.b16 %v515, %v509
  %v570 = vpack.c.b16 %v516, %v510
  %v571 = vpack.c.b16 %v517, %v511
  %v572 = vpack.c.b16 %v518, %v512
  %v573 = vpack.c.b16 %v519, %v513
  %v574 = vpack.c.b16 %v520, %v514
  %v575 = vpack.c.b16 %v527, %v521
  %v576 = vpack.c.b16 %v528, %v522
  %v577 = vpack.c.b16 %v529, %v523
  %v578 = vpack.c.b16 %v530, %v524
  %v579 = vpack.c.b16 %v531, %v525
  %v580 = vpack.c.b16 %v532, %v526
  %629 = vmatprep.subr.bf16.mxu0 %v228
  %630 = vmatpush1.bf16.msra.mxu0 %v227
  %631 = vmatprep.subr.bf16.mxu0 %v226
  %632 = vmatpush1.bf16.msra.mxu0 %v225
  %633 = vmatprep.subr.bf16.mxu0 %v224
  %634 = vmatpush1.bf16.msra.mxu0 %v223
  %635 = vmatprep.subr.bf16.mxu0 %v222
  %636 = vmatpush1.bf16.msra.mxu0 %v221
  %637 = vmatprep.subr.bf16.mxu0 %v220
  %638 = vmatpush1.bf16.msra.mxu0 %v219
  %639 = vmatprep.subr.bf16.mxu0 %v218
  %640 = vmatpush1.bf16.msra.mxu0 %v217
  %641 = vmatprep.subr.bf16.mxu0 %v216
  %642 = vmatpush1.bf16.msra.mxu0 %v215
  %643 = vmatprep.subr.bf16.mxu0 %v214
  %644 = vmatpush1.bf16.msra.mxu0 %v213
  %645 = vmatprep.subr.bf16.mxu0 %v244
  %646 = vmatpush2.bf16.msra.mxu0 %v243
  %647 = vmatprep.subr.bf16.mxu0 %v242
  %648 = vmatpush2.bf16.msra.mxu0 %v241
  %649 = vmatprep.subr.bf16.mxu0 %v240
  %650 = vmatpush2.bf16.msra.mxu0 %v239
  %651 = vmatprep.subr.bf16.mxu0 %v238
  %652 = vmatpush2.bf16.msra.mxu0 %v237
  %653 = vmatprep.subr.bf16.mxu0 %v236
  %654 = vmatpush2.bf16.msra.mxu0 %v235
  %655 = vmatprep.subr.bf16.mxu0 %v234
  %656 = vmatpush2.bf16.msra.mxu0 %v233
  %657 = vmatprep.subr.bf16.mxu0 %v232
  %658 = vmatpush2.bf16.msra.mxu0 %v231
  %659 = vmatprep.subr.bf16.mxu0 %v230
  %660 = vmatpush2.bf16.msra.mxu0 %v229
  %661 = vmatprep.mubr.bf16.mxu0 %v534
  %662 = vmatmul.mubr.bf16.gmra.mxu0 %v533
  %v663 = vpop.f32.mrf.mxu0
  %v664 = vadd.f32 %v357, %v663
  %v665 = vpop.f32.mrf.mxu0
  %v666 = vadd.f32 %v358, %v665
  %v667 = vpop.f32.mrf.mxu0
  %v668 = vadd.f32 %v359, %v667
  %v669 = vpop.f32.mrf.mxu0
  %v670 = vadd.f32 %v360, %v669
  %671 = vmatprep.mubr.bf16.mxu0 %v540
  %672 = vmatmul.mubr.bf16.gmra.mxu0 %v539
  %v673 = vpop.f32.mrf.mxu0
  %v674 = vadd.f32 %v361, %v673
  %v675 = vpop.f32.mrf.mxu0
  %v676 = vadd.f32 %v362, %v675
  %v677 = vpop.f32.mrf.mxu0
  %v678 = vadd.f32 %v363, %v677
  %v679 = vpop.f32.mrf.mxu0
  %v680 = vadd.f32 %v364, %v679
  %681 = vmatprep.mubr.bf16.mxu0 %v546
  %682 = vmatmul.mubr.bf16.gmra.mxu0 %v545
  %v683 = vpop.f32.mrf.mxu0
  %v684 = vadd.f32 %v365, %v683
  %v685 = vpop.f32.mrf.mxu0
  %v686 = vadd.f32 %v366, %v685
  %v687 = vpop.f32.mrf.mxu0
  %v688 = vadd.f32 %v367, %v687
  %v689 = vpop.f32.mrf.mxu0
  %v690 = vadd.f32 %v368, %v689
  %691 = vmatprep.mubr.bf16.mxu0 %v552
  %692 = vmatmul.mubr.bf16.gmra.mxu0 %v551
  %v693 = vpop.f32.mrf.mxu0
  %v694 = vadd.f32 %v369, %v693
  %v695 = vpop.f32.mrf.mxu0
  %v696 = vadd.f32 %v370, %v695
  %v697 = vpop.f32.mrf.mxu0
  %v698 = vadd.f32 %v371, %v697
  %v699 = vpop.f32.mrf.mxu0
  %v700 = vadd.f32 %v372, %v699
  %701 = vmatprep.mubr.bf16.mxu0 %v558
  %702 = vmatmul.mubr.bf16.gmra.mxu0 %v557
  %v703 = vpop.f32.mrf.mxu0
  %v704 = vadd.f32 %v373, %v703
  %v705 = vpop.f32.mrf.mxu0
  %v706 = vadd.f32 %v374, %v705
  %v707 = vpop.f32.mrf.mxu0
  %v708 = vadd.f32 %v375, %v707
  %v709 = vpop.f32.mrf.mxu0
  %v710 = vadd.f32 %v376, %v709
  %711 = vmatprep.mubr.bf16.mxu0 %v564
  %712 = vmatmul.mubr.bf16.gmra.mxu0 %v563
  %v713 = vpop.f32.mrf.mxu0
  %v714 = vadd.f32 %v377, %v713
  %v715 = vpop.f32.mrf.mxu0
  %v716 = vadd.f32 %v378, %v715
  %v717 = vpop.f32.mrf.mxu0
  %v718 = vadd.f32 %v379, %v717
  %v719 = vpop.f32.mrf.mxu0
  %v720 = vadd.f32 %v380, %v719
  %721 = vmatprep.mubr.bf16.mxu0 %v570
  %722 = vmatmul.mubr.bf16.gmra.mxu0 %v569
  %v723 = vpop.f32.mrf.mxu0
  %v724 = vadd.f32 %v381, %v723
  %v725 = vpop.f32.mrf.mxu0
  %v726 = vadd.f32 %v382, %v725
  %v727 = vpop.f32.mrf.mxu0
  %v728 = vadd.f32 %v383, %v727
  %v729 = vpop.f32.mrf.mxu0
  %v730 = vadd.f32 %v384, %v729
  %731 = vmatprep.mubr.bf16.mxu0 %v576
  %732 = vmatmul.mubr.bf16.gmra.mxu0 %v575
  %v733 = vpop.f32.mrf.mxu0
  %v734 = vadd.f32 %v385, %v733
  %v735 = vpop.f32.mrf.mxu0
  %v736 = vadd.f32 %v386, %v735
  %v737 = vpop.f32.mrf.mxu0
  %v738 = vadd.f32 %v387, %v737
  %v739 = vpop.f32.mrf.mxu0
  %v740 = vadd.f32 %v388, %v739
  %741 = vdwg.mxu0
  %742 = vmatprep.subr.bf16.mxu0 %v260
  %743 = vmatpush1.bf16.msra.mxu0 %v259
  %744 = vmatprep.subr.bf16.mxu0 %v258
  %745 = vmatpush1.bf16.msra.mxu0 %v257
  %746 = vmatprep.subr.bf16.mxu0 %v256
  %747 = vmatpush1.bf16.msra.mxu0 %v255
  %748 = vmatprep.subr.bf16.mxu0 %v254
  %749 = vmatpush1.bf16.msra.mxu0 %v253
  %750 = vmatprep.subr.bf16.mxu0 %v252
  %751 = vmatpush1.bf16.msra.mxu0 %v251
  %752 = vmatprep.subr.bf16.mxu0 %v250
  %753 = vmatpush1.bf16.msra.mxu0 %v249
  %754 = vmatprep.subr.bf16.mxu0 %v248
  %755 = vmatpush1.bf16.msra.mxu0 %v247
  %756 = vmatprep.subr.bf16.mxu0 %v246
  %757 = vmatpush1.bf16.msra.mxu0 %v245
  %758 = vmatprep.subr.bf16.mxu0 %v276
  %759 = vmatpush2.bf16.msra.mxu0 %v275
  %760 = vmatprep.subr.bf16.mxu0 %v274
  %761 = vmatpush2.bf16.msra.mxu0 %v273
  %762 = vmatprep.subr.bf16.mxu0 %v272
  %763 = vmatpush2.bf16.msra.mxu0 %v271
  %764 = vmatprep.subr.bf16.mxu0 %v270
  %765 = vmatpush2.bf16.msra.mxu0 %v269
  %766 = vmatprep.subr.bf16.mxu0 %v268
  %767 = vmatpush2.bf16.msra.mxu0 %v267
  %768 = vmatprep.subr.bf16.mxu0 %v266
  %769 = vmatpush2.bf16.msra.mxu0 %v265
  %770 = vmatprep.subr.bf16.mxu0 %v264
  %771 = vmatpush2.bf16.msra.mxu0 %v263
  %772 = vmatprep.subr.bf16.mxu0 %v262
  %773 = vmatpush2.bf16.msra.mxu0 %v261
  %774 = vmatprep.mubr.bf16.mxu0 %v536
  %775 = vmatmul.mubr.bf16.gmra.mxu0 %v535
  %v776 = vpop.f32.mrf.mxu0
  %v777 = vadd.f32 %v664, %v776
  %v778 = vpop.f32.mrf.mxu0
  %v779 = vadd.f32 %v666, %v778
  %v780 = vpop.f32.mrf.mxu0
  %v781 = vadd.f32 %v668, %v780
  %v782 = vpop.f32.mrf.mxu0
  %v783 = vadd.f32 %v670, %v782
  %784 = vmatprep.mubr.bf16.mxu0 %v542
  %785 = vmatmul.mubr.bf16.gmra.mxu0 %v541
  %v786 = vpop.f32.mrf.mxu0
  %v787 = vadd.f32 %v674, %v786
  %v788 = vpop.f32.mrf.mxu0
  %v789 = vadd.f32 %v676, %v788
  %v790 = vpop.f32.mrf.mxu0
  %v791 = vadd.f32 %v678, %v790
  %v792 = vpop.f32.mrf.mxu0
  %v793 = vadd.f32 %v680, %v792
  %794 = vmatprep.mubr.bf16.mxu0 %v548
  %795 = vmatmul.mubr.bf16.gmra.mxu0 %v547
  %v796 = vpop.f32.mrf.mxu0
  %v797 = vadd.f32 %v684, %v796
  %v798 = vpop.f32.mrf.mxu0
  %v799 = vadd.f32 %v686, %v798
  %v800 = vpop.f32.mrf.mxu0
  %v801 = vadd.f32 %v688, %v800
  %v802 = vpop.f32.mrf.mxu0
  %v803 = vadd.f32 %v690, %v802
  %804 = vmatprep.mubr.bf16.mxu0 %v554
  %805 = vmatmul.mubr.bf16.gmra.mxu0 %v553
  %v806 = vpop.f32.mrf.mxu0
  %v807 = vadd.f32 %v694, %v806
  %v808 = vpop.f32.mrf.mxu0
  %v809 = vadd.f32 %v696, %v808
  %v810 = vpop.f32.mrf.mxu0
  %v811 = vadd.f32 %v698, %v810
  %v812 = vpop.f32.mrf.mxu0
  %v813 = vadd.f32 %v700, %v812
  %814 = vmatprep.mubr.bf16.mxu0 %v560
  %815 = vmatmul.mubr.bf16.gmra.mxu0 %v559
  %v816 = vpop.f32.mrf.mxu0
  %v817 = vadd.f32 %v704, %v816
  %v818 = vpop.f32.mrf.mxu0
  %v819 = vadd.f32 %v706, %v818
  %v820 = vpop.f32.mrf.mxu0
  %v821 = vadd.f32 %v708, %v820
  %v822 = vpop.f32.mrf.mxu0
  %v823 = vadd.f32 %v710, %v822
  %824 = vmatprep.mubr.bf16.mxu0 %v566
  %825 = vmatmul.mubr.bf16.gmra.mxu0 %v565
  %v826 = vpop.f32.mrf.mxu0
  %v827 = vadd.f32 %v714, %v826
  %v828 = vpop.f32.mrf.mxu0
  %v829 = vadd.f32 %v716, %v828
  %v830 = vpop.f32.mrf.mxu0
  %v831 = vadd.f32 %v718, %v830
  %v832 = vpop.f32.mrf.mxu0
  %v833 = vadd.f32 %v720, %v832
  %834 = vmatprep.mubr.bf16.mxu0 %v572
  %835 = vmatmul.mubr.bf16.gmra.mxu0 %v571
  %v836 = vpop.f32.mrf.mxu0
  %v837 = vadd.f32 %v724, %v836
  %v838 = vpop.f32.mrf.mxu0
  %v839 = vadd.f32 %v726, %v838
  %v840 = vpop.f32.mrf.mxu0
  %v841 = vadd.f32 %v728, %v840
  %v842 = vpop.f32.mrf.mxu0
  %v843 = vadd.f32 %v730, %v842
  %844 = vmatprep.mubr.bf16.mxu0 %v578
  %845 = vmatmul.mubr.bf16.gmra.mxu0 %v577
  %v846 = vpop.f32.mrf.mxu0
  %v847 = vadd.f32 %v734, %v846
  %v848 = vpop.f32.mrf.mxu0
  %v849 = vadd.f32 %v736, %v848
  %v850 = vpop.f32.mrf.mxu0
  %v851 = vadd.f32 %v738, %v850
  %v852 = vpop.f32.mrf.mxu0
  %v853 = vadd.f32 %v740, %v852
  %854 = vdwg.mxu0
  %855 = vmatprep.subr.bf16.mxu0 %v292
  %856 = vmatpush1.bf16.msra.mxu0 %v291
  %857 = vmatprep.subr.bf16.mxu0 %v290
  %858 = vmatpush1.bf16.msra.mxu0 %v289
  %859 = vmatprep.subr.bf16.mxu0 %v288
  %860 = vmatpush1.bf16.msra.mxu0 %v287
  %861 = vmatprep.subr.bf16.mxu0 %v286
  %862 = vmatpush1.bf16.msra.mxu0 %v285
  %863 = vmatprep.subr.bf16.mxu0 %v284
  %864 = vmatpush1.bf16.msra.mxu0 %v283
  %865 = vmatprep.subr.bf16.mxu0 %v282
  %866 = vmatpush1.bf16.msra.mxu0 %v281
  %867 = vmatprep.subr.bf16.mxu0 %v280
  %868 = vmatpush1.bf16.msra.mxu0 %v279
  %869 = vmatprep.subr.bf16.mxu0 %v278
  %870 = vmatpush1.bf16.msra.mxu0 %v277
  %871 = vmatprep.subr.bf16.mxu0 %v308
  %872 = vmatpush2.bf16.msra.mxu0 %v307
  %873 = vmatprep.subr.bf16.mxu0 %v306
  %874 = vmatpush2.bf16.msra.mxu0 %v305
  %875 = vmatprep.subr.bf16.mxu0 %v304
  %876 = vmatpush2.bf16.msra.mxu0 %v303
  %877 = vmatprep.subr.bf16.mxu0 %v302
  %878 = vmatpush2.bf16.msra.mxu0 %v301
  %879 = vmatprep.subr.bf16.mxu0 %v300
  %880 = vmatpush2.bf16.msra.mxu0 %v299
  %881 = vmatprep.subr.bf16.mxu0 %v298
  %882 = vmatpush2.bf16.msra.mxu0 %v297
  %883 = vmatprep.subr.bf16.mxu0 %v296
  %884 = vmatpush2.bf16.msra.mxu0 %v295
  %885 = vmatprep.subr.bf16.mxu0 %v294
  %886 = vmatpush2.bf16.msra.mxu0 %v293
  %887 = vmatprep.mubr.bf16.mxu0 %v538
  %888 = vmatmul.mubr.bf16.gmra.mxu0 %v537
  %v889 = vpop.f32.mrf.mxu0
  %v890 = vadd.f32 %v777, %v889
  %v891 = vpop.f32.mrf.mxu0
  %v892 = vadd.f32 %v779, %v891
  %v893 = vpop.f32.mrf.mxu0
  %v894 = vadd.f32 %v781, %v893
  %v895 = vpop.f32.mrf.mxu0
  %v896 = vadd.f32 %v783, %v895
  %897 = vmatprep.mubr.bf16.mxu0 %v544
  %898 = vmatmul.mubr.bf16.gmra.mxu0 %v543
  %v899 = vpop.f32.mrf.mxu0
  %v900 = vadd.f32 %v787, %v899
  %v901 = vpop.f32.mrf.mxu0
  %v902 = vadd.f32 %v789, %v901
  %v903 = vpop.f32.mrf.mxu0
  %v904 = vadd.f32 %v791, %v903
  %v905 = vpop.f32.mrf.mxu0
  %v906 = vadd.f32 %v793, %v905
  %907 = vmatprep.mubr.bf16.mxu0 %v550
  %908 = vmatmul.mubr.bf16.gmra.mxu0 %v549
  %v909 = vpop.f32.mrf.mxu0
  %v910 = vadd.f32 %v797, %v909
  %v911 = vpop.f32.mrf.mxu0
  %v912 = vadd.f32 %v799, %v911
  %v913 = vpop.f32.mrf.mxu0
  %v914 = vadd.f32 %v801, %v913
  %v915 = vpop.f32.mrf.mxu0
  %v916 = vadd.f32 %v803, %v915
  %917 = vmatprep.mubr.bf16.mxu0 %v556
  %918 = vmatmul.mubr.bf16.gmra.mxu0 %v555
  %v919 = vpop.f32.mrf.mxu0
  %v920 = vadd.f32 %v807, %v919
  %v921 = vpop.f32.mrf.mxu0
  %v922 = vadd.f32 %v809, %v921
  %v923 = vpop.f32.mrf.mxu0
  %v924 = vadd.f32 %v811, %v923
  %v925 = vpop.f32.mrf.mxu0
  %v926 = vadd.f32 %v813, %v925
  %927 = vmatprep.mubr.bf16.mxu0 %v562
  %928 = vmatmul.mubr.bf16.gmra.mxu0 %v561
  %v929 = vpop.f32.mrf.mxu0
  %v930 = vadd.f32 %v817, %v929
  %v931 = vpop.f32.mrf.mxu0
  %v932 = vadd.f32 %v819, %v931
  %v933 = vpop.f32.mrf.mxu0
  %v934 = vadd.f32 %v821, %v933
  %v935 = vpop.f32.mrf.mxu0
  %v936 = vadd.f32 %v823, %v935
  %937 = vmatprep.mubr.bf16.mxu0 %v568
  %938 = vmatmul.mubr.bf16.gmra.mxu0 %v567
  %v939 = vpop.f32.mrf.mxu0
  %v940 = vadd.f32 %v827, %v939
  %v941 = vpop.f32.mrf.mxu0
  %v942 = vadd.f32 %v829, %v941
  %v943 = vpop.f32.mrf.mxu0
  %v944 = vadd.f32 %v831, %v943
  %v945 = vpop.f32.mrf.mxu0
  %v946 = vadd.f32 %v833, %v945
  %947 = vmatprep.mubr.bf16.mxu0 %v574
  %948 = vmatmul.mubr.bf16.gmra.mxu0 %v573
  %v949 = vpop.f32.mrf.mxu0
  %v950 = vadd.f32 %v837, %v949
  %v951 = vpop.f32.mrf.mxu0
  %v952 = vadd.f32 %v839, %v951
  %v953 = vpop.f32.mrf.mxu0
  %v954 = vadd.f32 %v841, %v953
  %v955 = vpop.f32.mrf.mxu0
  %v956 = vadd.f32 %v843, %v955
  %957 = vmatprep.mubr.bf16.mxu0 %v580
  %958 = vmatmul.mubr.bf16.gmra.mxu0 %v579
  %v959 = vpop.f32.mrf.mxu0
  %v960 = vadd.f32 %v847, %v959
  %v961 = vpop.f32.mrf.mxu0
  %v962 = vadd.f32 %v849, %v961
  %v963 = vpop.f32.mrf.mxu0
  %v964 = vadd.f32 %v851, %v963
  %v965 = vpop.f32.mrf.mxu0
  %v966 = vadd.f32 %v853, %v965
  %967 = vdwg.mxu0
  %v968 = vld [vmem:[%s3] sm:$0xf]
  %v969 = vld [vmem:[%s3 + $0x4] sm:$0xf]
  %v970 = vld [vmem:[%s3 + $0x8] sm:$0xf]
  %v971 = vld [vmem:[%s3 + $0xc] sm:$0xf]
  %v972 = vld [vmem:[%s3 + $0x10] sm:$0xf]
  %v973 = vld [vmem:[%s3 + $0x14] sm:$0xf]
  %v974 = vld [vmem:[%s3 + $0x18] sm:$0xf]
  %v975 = vld [vmem:[%s3 + $0x1c] sm:$0xf]
  %v976 = vld [vmem:[%s3 + $0x20] sm:$0xf]
  %v977 = vld [vmem:[%s3 + $0x24] sm:$0xf]
  %v978 = vld [vmem:[%s3 + $0x28] sm:$0xf]
  %v979 = vld [vmem:[%s3 + $0x2c] sm:$0xf]
  %v980 = vld [vmem:[%s3 + $0x30] sm:$0xf]
  %v981 = vld [vmem:[%s3 + $0x34] sm:$0xf]
  %v982 = vld [vmem:[%s3 + $0x38] sm:$0xf]
  %v983 = vld [vmem:[%s3 + $0x3c] sm:$0xf]
  %v984 = vld [vmem:[%s3 + $0x40] sm:$0xf]
  %v985 = vld [vmem:[%s3 + $0x44] sm:$0xf]
  %v986 = vld [vmem:[%s3 + $0x48] sm:$0xf]
  %v987 = vld [vmem:[%s3 + $0x4c] sm:$0xf]
  %v988 = vld [vmem:[%s3 + $0x50] sm:$0xf]
  %v989 = vld [vmem:[%s3 + $0x54] sm:$0xf]
  %v990 = vld [vmem:[%s3 + $0x58] sm:$0xf]
  %v991 = vld [vmem:[%s3 + $0x5c] sm:$0xf]
  %v992 = vld [vmem:[%s3 + $0x60] sm:$0xf]
  %v993 = vld [vmem:[%s3 + $0x64] sm:$0xf]
  %v994 = vld [vmem:[%s3 + $0x68] sm:$0xf]
  %v995 = vld [vmem:[%s3 + $0x6c] sm:$0xf]
  %v996 = vld [vmem:[%s3 + $0x70] sm:$0xf]
  %v997 = vld [vmem:[%s3 + $0x74] sm:$0xf]
  %v998 = vld [vmem:[%s3 + $0x78] sm:$0xf]
  %v999 = vld [vmem:[%s3 + $0x7c] sm:$0xf]
  %v1000 = vld [vmem:[%s3 + $0x80] sm:$0xf]
  %v1001 = vld [vmem:[%s3 + $0x84] sm:$0xf]
  %v1002 = vld [vmem:[%s3 + $0x88] sm:$0xf]
  %v1003 = vld [vmem:[%s3 + $0x8c] sm:$0xf]
  %v1004 = vld [vmem:[%s3 + $0x90] sm:$0xf]
  %v1005 = vld [vmem:[%s3 + $0x94] sm:$0xf]
  %v1006 = vld [vmem:[%s3 + $0x98] sm:$0xf]
  %v1007 = vld [vmem:[%s3 + $0x9c] sm:$0xf]
  %v1008 = vld [vmem:[%s3 + $0xa0] sm:$0xf]
  %v1009 = vld [vmem:[%s3 + $0xa4] sm:$0xf]
  %v1010 = vld [vmem:[%s3 + $0xa8] sm:$0xf]
  %v1011 = vld [vmem:[%s3 + $0xac] sm:$0xf]
  %v1012 = vld [vmem:[%s3 + $0xb0] sm:$0xf]
  %v1013 = vld [vmem:[%s3 + $0xb4] sm:$0xf]
  %v1014 = vld [vmem:[%s3 + $0xb8] sm:$0xf]
  %v1015 = vld [vmem:[%s3 + $0xbc] sm:$0xf]
  %v1016 = vld [vmem:[%s3 + $0xc0] sm:$0xf]
  %v1017 = vld [vmem:[%s3 + $0xc4] sm:$0xf]
  %v1018 = vld [vmem:[%s3 + $0xc8] sm:$0xf]
  %v1019 = vld [vmem:[%s3 + $0xcc] sm:$0xf]
  %v1020 = vld [vmem:[%s3 + $0xd0] sm:$0xf]
  %v1021 = vld [vmem:[%s3 + $0xd4] sm:$0xf]
  %v1022 = vld [vmem:[%s3 + $0xd8] sm:$0xf]
  %v1023 = vld [vmem:[%s3 + $0xdc] sm:$0xf]
  %v1024 = vld [vmem:[%s3 + $0xe0] sm:$0xf]
  %v1025 = vld [vmem:[%s3 + $0xe4] sm:$0xf]
  %v1026 = vld [vmem:[%s3 + $0xe8] sm:$0xf]
  %v1027 = vld [vmem:[%s3 + $0xec] sm:$0xf]
  %v1028 = vld [vmem:[%s3 + $0xf0] sm:$0xf]
  %v1029 = vld [vmem:[%s3 + $0xf4] sm:$0xf]
  %v1030 = vld [vmem:[%s3 + $0xf8] sm:$0xf]
  %v1031 = vld [vmem:[%s3 + $0xfc] sm:$0xf]
  %v1032 = vld [vmem:[%s3 + $0x100] sm:$0xf]
  %v1033 = vld [vmem:[%s3 + $0x104] sm:$0xf]
  %v1034 = vld [vmem:[%s3 + $0x108] sm:$0xf]
  %v1035 = vld [vmem:[%s3 + $0x10c] sm:$0xf]
  %v1036 = vld [vmem:[%s3 + $0x110] sm:$0xf]
  %v1037 = vld [vmem:[%s3 + $0x114] sm:$0xf]
  %v1038 = vld [vmem:[%s3 + $0x118] sm:$0xf]
  %v1039 = vld [vmem:[%s3 + $0x11c] sm:$0xf]
  %v1040 = vld [vmem:[%s3 + $0x120] sm:$0xf]
  %v1041 = vld [vmem:[%s3 + $0x124] sm:$0xf]
  %v1042 = vld [vmem:[%s3 + $0x128] sm:$0xf]
  %v1043 = vld [vmem:[%s3 + $0x12c] sm:$0xf]
  %v1044 = vld [vmem:[%s3 + $0x130] sm:$0xf]
  %v1045 = vld [vmem:[%s3 + $0x134] sm:$0xf]
  %v1046 = vld [vmem:[%s3 + $0x138] sm:$0xf]
  %v1047 = vld [vmem:[%s3 + $0x13c] sm:$0xf]
  %v1048 = vld [vmem:[%s3 + $0x140] sm:$0xf]
  %v1049 = vld [vmem:[%s3 + $0x144] sm:$0xf]
  %v1050 = vld [vmem:[%s3 + $0x148] sm:$0xf]
  %v1051 = vld [vmem:[%s3 + $0x14c] sm:$0xf]
  %v1052 = vld [vmem:[%s3 + $0x150] sm:$0xf]
  %v1053 = vld [vmem:[%s3 + $0x154] sm:$0xf]
  %v1054 = vld [vmem:[%s3 + $0x158] sm:$0xf]
  %v1055 = vld [vmem:[%s3 + $0x15c] sm:$0xf]
  %v1056 = vld [vmem:[%s3 + $0x160] sm:$0xf]
  %v1057 = vld [vmem:[%s3 + $0x164] sm:$0xf]
  %v1058 = vld [vmem:[%s3 + $0x168] sm:$0xf]
  %v1059 = vld [vmem:[%s3 + $0x16c] sm:$0xf]
  %v1060 = vld [vmem:[%s3 + $0x170] sm:$0xf]
  %v1061 = vld [vmem:[%s3 + $0x174] sm:$0xf]
  %v1062 = vld [vmem:[%s3 + $0x178] sm:$0xf]
  %v1063 = vld [vmem:[%s3 + $0x17c] sm:$0xf]
  %v1064 = vpack.c.bf16 %v894, %v890
  %v1065 = vpack.c.bf16 %v896, %v892
  %v1066 = vpack.c.bf16 %v904, %v900
  %v1067 = vpack.c.bf16 %v906, %v902
  %v1068 = vpack.c.bf16 %v914, %v910
  %v1069 = vpack.c.bf16 %v916, %v912
  %v1070 = vpack.c.bf16 %v924, %v920
  %v1071 = vpack.c.bf16 %v926, %v922
  %v1072 = vpack.c.bf16 %v934, %v930
  %v1073 = vpack.c.bf16 %v936, %v932
  %v1074 = vpack.c.bf16 %v944, %v940
  %v1075 = vpack.c.bf16 %v946, %v942
  %v1076 = vpack.c.bf16 %v954, %v950
  %v1077 = vpack.c.bf16 %v956, %v952
  %v1078 = vpack.c.bf16 %v964, %v960
  %v1079 = vpack.c.bf16 %v966, %v962
  %v1080 = vld [vmem:[%s4] sm:$0xff]
  %v1081 = vld [vmem:[%s4 + $0x8] sm:$0xff]
  %v1082 = vld [vmem:[%s4 + $0x10] sm:$0xff]
  %v1083 = vld [vmem:[%s4 + $0x18] sm:$0xff]
  %v1084 = vld [vmem:[%s4 + $0x20] sm:$0xff]
  %v1085 = vld [vmem:[%s4 + $0x28] sm:$0xff]
  %v1086 = vld [vmem:[%s4 + $0x30] sm:$0xff]
  %v1087 = vld [vmem:[%s4 + $0x38] sm:$0xff]
  %v1088 = vld [vmem:[%s4 + $0x40] sm:$0xff]
  %v1089 = vld [vmem:[%s4 + $0x48] sm:$0xff]
  %v1090 = vld [vmem:[%s4 + $0x50] sm:$0xff]
  %v1091 = vld [vmem:[%s4 + $0x58] sm:$0xff]
  %v1092 = vld [vmem:[%s4 + $0x60] sm:$0xff]
  %v1093 = vld [vmem:[%s4 + $0x68] sm:$0xff]
  %v1094 = vld [vmem:[%s4 + $0x70] sm:$0xff]
  %v1095 = vld [vmem:[%s4 + $0x78] sm:$0xff]
  %v1096 = vld [vmem:[%s4 + $0x80] sm:$0xff]
  %v1097 = vld [vmem:[%s4 + $0x88] sm:$0xff]
  %v1098 = vld [vmem:[%s4 + $0x90] sm:$0xff]
  %v1099 = vld [vmem:[%s4 + $0x98] sm:$0xff]
  %v1100 = vld [vmem:[%s4 + $0xa0] sm:$0xff]
  %v1101 = vld [vmem:[%s4 + $0xa8] sm:$0xff]
  %v1102 = vld [vmem:[%s4 + $0xb0] sm:$0xff]
  %v1103 = vld [vmem:[%s4 + $0xb8] sm:$0xff]
  %v1104 = vld [vmem:[%s4 + $0xc0] sm:$0xff]
  %v1105 = vld [vmem:[%s4 + $0xc8] sm:$0xff]
  %v1106 = vld [vmem:[%s4 + $0xd0] sm:$0xff]
  %v1107 = vld [vmem:[%s4 + $0xd8] sm:$0xff]
  %v1108 = vld [vmem:[%s4 + $0xe0] sm:$0xff]
  %v1109 = vld [vmem:[%s4 + $0xe8] sm:$0xff]
  %v1110 = vld [vmem:[%s4 + $0xf0] sm:$0xff]
  %v1111 = vld [vmem:[%s4 + $0xf8] sm:$0xff]
  %v1112 = vld [vmem:[%s4 + $0x100] sm:$0xff]
  %v1113 = vld [vmem:[%s4 + $0x108] sm:$0xff]
  %v1114 = vld [vmem:[%s4 + $0x110] sm:$0xff]
  %v1115 = vld [vmem:[%s4 + $0x118] sm:$0xff]
  %v1116 = vld [vmem:[%s4 + $0x120] sm:$0xff]
  %v1117 = vld [vmem:[%s4 + $0x128] sm:$0xff]
  %v1118 = vld [vmem:[%s4 + $0x130] sm:$0xff]
  %v1119 = vld [vmem:[%s4 + $0x138] sm:$0xff]
  %v1120 = vld [vmem:[%s4 + $0x140] sm:$0xff]
  %v1121 = vld [vmem:[%s4 + $0x148] sm:$0xff]
  %v1122 = vld [vmem:[%s4 + $0x150] sm:$0xff]
  %v1123 = vld [vmem:[%s4 + $0x158] sm:$0xff]
  %v1124 = vld [vmem:[%s4 + $0x160] sm:$0xff]
  %v1125 = vld [vmem:[%s4 + $0x168] sm:$0xff]
  %v1126 = vld [vmem:[%s4 + $0x170] sm:$0xff]
  %v1127 = vld [vmem:[%s4 + $0x178] sm:$0xff]
  %v1128 = vld [vmem:[%s4 + $0x180] sm:$0xff]
  %v1129 = vld [vmem:[%s4 + $0x188] sm:$0xff]
  %v1130 = vld [vmem:[%s4 + $0x190] sm:$0xff]
  %v1131 = vld [vmem:[%s4 + $0x198] sm:$0xff]
  %v1132 = vld [vmem:[%s4 + $0x1a0] sm:$0xff]
  %v1133 = vld [vmem:[%s4 + $0x1a8] sm:$0xff]
  %v1134 = vld [vmem:[%s4 + $0x1b0] sm:$0xff]
  %v1135 = vld [vmem:[%s4 + $0x1b8] sm:$0xff]
  %v1136 = vld [vmem:[%s4 + $0x1c0] sm:$0xff]
  %v1137 = vld [vmem:[%s4 + $0x1c8] sm:$0xff]
  %v1138 = vld [vmem:[%s4 + $0x1d0] sm:$0xff]
  %v1139 = vld [vmem:[%s4 + $0x1d8] sm:$0xff]
  %v1140 = vld [vmem:[%s4 + $0x1e0] sm:$0xff]
  %v1141 = vld [vmem:[%s4 + $0x1e8] sm:$0xff]
  %v1142 = vld [vmem:[%s4 + $0x1f0] sm:$0xff]
  %v1143 = vld [vmem:[%s4 + $0x1f8] sm:$0xff]
  %v1144 = vld [vmem:[%s4 + $0x200] sm:$0xff]
  %v1145 = vld [vmem:[%s4 + $0x208] sm:$0xff]
  %v1146 = vld [vmem:[%s4 + $0x210] sm:$0xff]
  %v1147 = vld [vmem:[%s4 + $0x218] sm:$0xff]
  %v1148 = vld [vmem:[%s4 + $0x220] sm:$0xff]
  %v1149 = vld [vmem:[%s4 + $0x228] sm:$0xff]
  %v1150 = vld [vmem:[%s4 + $0x230] sm:$0xff]
  %v1151 = vld [vmem:[%s4 + $0x238] sm:$0xff]
  %v1152 = vld [vmem:[%s4 + $0x240] sm:$0xff]
  %v1153 = vld [vmem:[%s4 + $0x248] sm:$0xff]
  %v1154 = vld [vmem:[%s4 + $0x250] sm:$0xff]
  %v1155 = vld [vmem:[%s4 + $0x258] sm:$0xff]
  %v1156 = vld [vmem:[%s4 + $0x260] sm:$0xff]
  %v1157 = vld [vmem:[%s4 + $0x268] sm:$0xff]
  %v1158 = vld [vmem:[%s4 + $0x270] sm:$0xff]
  %v1159 = vld [vmem:[%s4 + $0x278] sm:$0xff]
  %v1160 = vld [vmem:[%s4 + $0x280] sm:$0xff]
  %v1161 = vld [vmem:[%s4 + $0x288] sm:$0xff]
  %v1162 = vld [vmem:[%s4 + $0x290] sm:$0xff]
  %v1163 = vld [vmem:[%s4 + $0x298] sm:$0xff]
  %v1164 = vld [vmem:[%s4 + $0x2a0] sm:$0xff]
  %v1165 = vld [vmem:[%s4 + $0x2a8] sm:$0xff]
  %v1166 = vld [vmem:[%s4 + $0x2b0] sm:$0xff]
  %v1167 = vld [vmem:[%s4 + $0x2b8] sm:$0xff]
  %v1168 = vld [vmem:[%s4 + $0x2c0] sm:$0xff]
  %v1169 = vld [vmem:[%s4 + $0x2c8] sm:$0xff]
  %v1170 = vld [vmem:[%s4 + $0x2d0] sm:$0xff]
  %v1171 = vld [vmem:[%s4 + $0x2d8] sm:$0xff]
  %v1172 = vld [vmem:[%s4 + $0x2e0] sm:$0xff]
  %v1173 = vld [vmem:[%s4 + $0x2e8] sm:$0xff]
  %v1174 = vld [vmem:[%s4 + $0x2f0] sm:$0xff]
  %v1175 = vld [vmem:[%s4 + $0x2f8] sm:$0xff]
  %1177 = vset.pattern.permute.xlu0 0
  %1178 = vperm.xlu0 %1177, %v1080
  %v1179 = vpop.permute.xlu0 %1178
  %1182 = vset.pattern.permute.xlu0 0
  %1183 = vperm.xlu0 %1182, %v1081
  %v1184 = vpop.permute.xlu0 %1183
  %1187 = vset.pattern.permute.xlu0 0
  %1188 = vperm.xlu0 %1187, %v1082
  %v1189 = vpop.permute.xlu0 %1188
  %1192 = vset.pattern.permute.xlu0 0
  %1193 = vperm.xlu0 %1192, %v1083
  %v1194 = vpop.permute.xlu0 %1193
  %1197 = vset.pattern.permute.xlu0 0
  %1198 = vperm.xlu0 %1197, %v1084
  %v1199 = vpop.permute.xlu0 %1198
  %1202 = vset.pattern.permute.xlu0 0
  %1203 = vperm.xlu0 %1202, %v1085
  %v1204 = vpop.permute.xlu0 %1203
  %1207 = vset.pattern.permute.xlu0 0
  %1208 = vperm.xlu0 %1207, %v1086
  %v1209 = vpop.permute.xlu0 %1208
  %1212 = vset.pattern.permute.xlu0 0
  %1213 = vperm.xlu0 %1212, %v1087
  %v1214 = vpop.permute.xlu0 %1213
  %1217 = vset.pattern.permute.xlu0 0
  %1218 = vperm.xlu0 %1217, %v1088
  %v1219 = vpop.permute.xlu0 %1218
  %1222 = vset.pattern.permute.xlu0 0
  %1223 = vperm.xlu0 %1222, %v1089
  %v1224 = vpop.permute.xlu0 %1223
  %1227 = vset.pattern.permute.xlu0 0
  %1228 = vperm.xlu0 %1227, %v1090
  %v1229 = vpop.permute.xlu0 %1228
  %1232 = vset.pattern.permute.xlu0 0
  %1233 = vperm.xlu0 %1232, %v1091
  %v1234 = vpop.permute.xlu0 %1233
  %1237 = vset.pattern.permute.xlu0 0
  %1238 = vperm.xlu0 %1237, %v1092
  %v1239 = vpop.permute.xlu0 %1238
  %1242 = vset.pattern.permute.xlu0 0
  %1243 = vperm.xlu0 %1242, %v1093
  %v1244 = vpop.permute.xlu0 %1243
  %1247 = vset.pattern.permute.xlu0 0
  %1248 = vperm.xlu0 %1247, %v1094
  %v1249 = vpop.permute.xlu0 %1248
  %1252 = vset.pattern.permute.xlu0 0
  %1253 = vperm.xlu0 %1252, %v1095
  %v1254 = vpop.permute.xlu0 %1253
  %1257 = vset.pattern.permute.xlu0 0
  %1258 = vperm.xlu0 %1257, %v1096
  %v1259 = vpop.permute.xlu0 %1258
  %1262 = vset.pattern.permute.xlu0 0
  %1263 = vperm.xlu0 %1262, %v1097
  %v1264 = vpop.permute.xlu0 %1263
  %1267 = vset.pattern.permute.xlu0 0
  %1268 = vperm.xlu0 %1267, %v1098
  %v1269 = vpop.permute.xlu0 %1268
  %1272 = vset.pattern.permute.xlu0 0
  %1273 = vperm.xlu0 %1272, %v1099
  %v1274 = vpop.permute.xlu0 %1273
  %1277 = vset.pattern.permute.xlu0 0
  %1278 = vperm.xlu0 %1277, %v1100
  %v1279 = vpop.permute.xlu0 %1278
  %1282 = vset.pattern.permute.xlu0 0
  %1283 = vperm.xlu0 %1282, %v1101
  %v1284 = vpop.permute.xlu0 %1283
  %1287 = vset.pattern.permute.xlu0 0
  %1288 = vperm.xlu0 %1287, %v1102
  %v1289 = vpop.permute.xlu0 %1288
  %1292 = vset.pattern.permute.xlu0 0
  %1293 = vperm.xlu0 %1292, %v1103
  %v1294 = vpop.permute.xlu0 %1293
  %1297 = vset.pattern.permute.xlu0 0
  %1298 = vperm.xlu0 %1297, %v1104
  %v1299 = vpop.permute.xlu0 %1298
  %1302 = vset.pattern.permute.xlu0 0
  %1303 = vperm.xlu0 %1302, %v1105
  %v1304 = vpop.permute.xlu0 %1303
  %1307 = vset.pattern.permute.xlu0 0
  %1308 = vperm.xlu0 %1307, %v1106
  %v1309 = vpop.permute.xlu0 %1308
  %1312 = vset.pattern.permute.xlu0 0
  %1313 = vperm.xlu0 %1312, %v1107
  %v1314 = vpop.permute.xlu0 %1313
  %1317 = vset.pattern.permute.xlu0 0
  %1318 = vperm.xlu0 %1317, %v1108
  %v1319 = vpop.permute.xlu0 %1318
  %1322 = vset.pattern.permute.xlu0 0
  %1323 = vperm.xlu0 %1322, %v1109
  %v1324 = vpop.permute.xlu0 %1323
  %1327 = vset.pattern.permute.xlu0 0
  %1328 = vperm.xlu0 %1327, %v1110
  %v1329 = vpop.permute.xlu0 %1328
  %1332 = vset.pattern.permute.xlu0 0
  %1333 = vperm.xlu0 %1332, %v1111
  %v1334 = vpop.permute.xlu0 %1333
  %1337 = vset.pattern.permute.xlu0 0
  %1338 = vperm.xlu0 %1337, %v1112
  %v1339 = vpop.permute.xlu0 %1338
  %1342 = vset.pattern.permute.xlu0 0
  %1343 = vperm.xlu0 %1342, %v1113
  %v1344 = vpop.permute.xlu0 %1343
  %1347 = vset.pattern.permute.xlu0 0
  %1348 = vperm.xlu0 %1347, %v1114
  %v1349 = vpop.permute.xlu0 %1348
  %1352 = vset.pattern.permute.xlu0 0
  %1353 = vperm.xlu0 %1352, %v1115
  %v1354 = vpop.permute.xlu0 %1353
  %1357 = vset.pattern.permute.xlu0 0
  %1358 = vperm.xlu0 %1357, %v1116
  %v1359 = vpop.permute.xlu0 %1358
  %1362 = vset.pattern.permute.xlu0 0
  %1363 = vperm.xlu0 %1362, %v1117
  %v1364 = vpop.permute.xlu0 %1363
  %1367 = vset.pattern.permute.xlu0 0
  %1368 = vperm.xlu0 %1367, %v1118
  %v1369 = vpop.permute.xlu0 %1368
  %1372 = vset.pattern.permute.xlu0 0
  %1373 = vperm.xlu0 %1372, %v1119
  %v1374 = vpop.permute.xlu0 %1373
  %1377 = vset.pattern.permute.xlu0 0
  %1378 = vperm.xlu0 %1377, %v1120
  %v1379 = vpop.permute.xlu0 %1378
  %1382 = vset.pattern.permute.xlu0 0
  %1383 = vperm.xlu0 %1382, %v1121
  %v1384 = vpop.permute.xlu0 %1383
  %1387 = vset.pattern.permute.xlu0 0
  %1388 = vperm.xlu0 %1387, %v1122
  %v1389 = vpop.permute.xlu0 %1388
  %1392 = vset.pattern.permute.xlu0 0
  %1393 = vperm.xlu0 %1392, %v1123
  %v1394 = vpop.permute.xlu0 %1393
  %1397 = vset.pattern.permute.xlu0 0
  %1398 = vperm.xlu0 %1397, %v1124
  %v1399 = vpop.permute.xlu0 %1398
  %1402 = vset.pattern.permute.xlu0 0
  %1403 = vperm.xlu0 %1402, %v1125
  %v1404 = vpop.permute.xlu0 %1403
  %1407 = vset.pattern.permute.xlu0 0
  %1408 = vperm.xlu0 %1407, %v1126
  %v1409 = vpop.permute.xlu0 %1408
  %1412 = vset.pattern.permute.xlu0 0
  %1413 = vperm.xlu0 %1412, %v1127
  %v1414 = vpop.permute.xlu0 %1413
  %1417 = vset.pattern.permute.xlu0 0
  %1418 = vperm.xlu0 %1417, %v1128
  %v1419 = vpop.permute.xlu0 %1418
  %1422 = vset.pattern.permute.xlu0 0
  %1423 = vperm.xlu0 %1422, %v1129
  %v1424 = vpop.permute.xlu0 %1423
  %1427 = vset.pattern.permute.xlu0 0
  %1428 = vperm.xlu0 %1427, %v1130
  %v1429 = vpop.permute.xlu0 %1428
  %1432 = vset.pattern.permute.xlu0 0
  %1433 = vperm.xlu0 %1432, %v1131
  %v1434 = vpop.permute.xlu0 %1433
  %1437 = vset.pattern.permute.xlu0 0
  %1438 = vperm.xlu0 %1437, %v1132
  %v1439 = vpop.permute.xlu0 %1438
  %1442 = vset.pattern.permute.xlu0 0
  %1443 = vperm.xlu0 %1442, %v1133
  %v1444 = vpop.permute.xlu0 %1443
  %1447 = vset.pattern.permute.xlu0 0
  %1448 = vperm.xlu0 %1447, %v1134
  %v1449 = vpop.permute.xlu0 %1448
  %1452 = vset.pattern.permute.xlu0 0
  %1453 = vperm.xlu0 %1452, %v1135
  %v1454 = vpop.permute.xlu0 %1453
  %1457 = vset.pattern.permute.xlu0 0
  %1458 = vperm.xlu0 %1457, %v1136
  %v1459 = vpop.permute.xlu0 %1458
  %1462 = vset.pattern.permute.xlu0 0
  %1463 = vperm.xlu0 %1462, %v1137
  %v1464 = vpop.permute.xlu0 %1463
  %1467 = vset.pattern.permute.xlu0 0
  %1468 = vperm.xlu0 %1467, %v1138
  %v1469 = vpop.permute.xlu0 %1468
  %1472 = vset.pattern.permute.xlu0 0
  %1473 = vperm.xlu0 %1472, %v1139
  %v1474 = vpop.permute.xlu0 %1473
  %1477 = vset.pattern.permute.xlu0 0
  %1478 = vperm.xlu0 %1477, %v1140
  %v1479 = vpop.permute.xlu0 %1478
  %1482 = vset.pattern.permute.xlu0 0
  %1483 = vperm.xlu0 %1482, %v1141
  %v1484 = vpop.permute.xlu0 %1483
  %1487 = vset.pattern.permute.xlu0 0
  %1488 = vperm.xlu0 %1487, %v1142
  %v1489 = vpop.permute.xlu0 %1488
  %1492 = vset.pattern.permute.xlu0 0
  %1493 = vperm.xlu0 %1492, %v1143
  %v1494 = vpop.permute.xlu0 %1493
  %1497 = vset.pattern.permute.xlu0 0
  %1498 = vperm.xlu0 %1497, %v1144
  %v1499 = vpop.permute.xlu0 %1498
  %1502 = vset.pattern.permute.xlu0 0
  %1503 = vperm.xlu0 %1502, %v1145
  %v1504 = vpop.permute.xlu0 %1503
  %1507 = vset.pattern.permute.xlu0 0
  %1508 = vperm.xlu0 %1507, %v1146
  %v1509 = vpop.permute.xlu0 %1508
  %1512 = vset.pattern.permute.xlu0 0
  %1513 = vperm.xlu0 %1512, %v1147
  %v1514 = vpop.permute.xlu0 %1513
  %1517 = vset.pattern.permute.xlu0 0
  %1518 = vperm.xlu0 %1517, %v1148
  %v1519 = vpop.permute.xlu0 %1518
  %1522 = vset.pattern.permute.xlu0 0
  %1523 = vperm.xlu0 %1522, %v1149
  %v1524 = vpop.permute.xlu0 %1523
  %1527 = vset.pattern.permute.xlu0 0
  %1528 = vperm.xlu0 %1527, %v1150
  %v1529 = vpop.permute.xlu0 %1528
  %1532 = vset.pattern.permute.xlu0 0
  %1533 = vperm.xlu0 %1532, %v1151
  %v1534 = vpop.permute.xlu0 %1533
  %1537 = vset.pattern.permute.xlu0 0
  %1538 = vperm.xlu0 %1537, %v1152
  %v1539 = vpop.permute.xlu0 %1538
  %1542 = vset.pattern.permute.xlu0 0
  %1543 = vperm.xlu0 %1542, %v1153
  %v1544 = vpop.permute.xlu0 %1543
  %1547 = vset.pattern.permute.xlu0 0
  %1548 = vperm.xlu0 %1547, %v1154
  %v1549 = vpop.permute.xlu0 %1548
  %1552 = vset.pattern.permute.xlu0 0
  %1553 = vperm.xlu0 %1552, %v1155
  %v1554 = vpop.permute.xlu0 %1553
  %1557 = vset.pattern.permute.xlu0 0
  %1558 = vperm.xlu0 %1557, %v1156
  %v1559 = vpop.permute.xlu0 %1558
  %1562 = vset.pattern.permute.xlu0 0
  %1563 = vperm.xlu0 %1562, %v1157
  %v1564 = vpop.permute.xlu0 %1563
  %1567 = vset.pattern.permute.xlu0 0
  %1568 = vperm.xlu0 %1567, %v1158
  %v1569 = vpop.permute.xlu0 %1568
  %1572 = vset.pattern.permute.xlu0 0
  %1573 = vperm.xlu0 %1572, %v1159
  %v1574 = vpop.permute.xlu0 %1573
  %1577 = vset.pattern.permute.xlu0 0
  %1578 = vperm.xlu0 %1577, %v1160
  %v1579 = vpop.permute.xlu0 %1578
  %1582 = vset.pattern.permute.xlu0 0
  %1583 = vperm.xlu0 %1582, %v1161
  %v1584 = vpop.permute.xlu0 %1583
  %1587 = vset.pattern.permute.xlu0 0
  %1588 = vperm.xlu0 %1587, %v1162
  %v1589 = vpop.permute.xlu0 %1588
  %1592 = vset.pattern.permute.xlu0 0
  %1593 = vperm.xlu0 %1592, %v1163
  %v1594 = vpop.permute.xlu0 %1593
  %1597 = vset.pattern.permute.xlu0 0
  %1598 = vperm.xlu0 %1597, %v1164
  %v1599 = vpop.permute.xlu0 %1598
  %1602 = vset.pattern.permute.xlu0 0
  %1603 = vperm.xlu0 %1602, %v1165
  %v1604 = vpop.permute.xlu0 %1603
  %1607 = vset.pattern.permute.xlu0 0
  %1608 = vperm.xlu0 %1607, %v1166
  %v1609 = vpop.permute.xlu0 %1608
  %1612 = vset.pattern.permute.xlu0 0
  %1613 = vperm.xlu0 %1612, %v1167
  %v1614 = vpop.permute.xlu0 %1613
  %1617 = vset.pattern.permute.xlu0 0
  %1618 = vperm.xlu0 %1617, %v1168
  %v1619 = vpop.permute.xlu0 %1618
  %1622 = vset.pattern.permute.xlu0 0
  %1623 = vperm.xlu0 %1622, %v1169
  %v1624 = vpop.permute.xlu0 %1623
  %1627 = vset.pattern.permute.xlu0 0
  %1628 = vperm.xlu0 %1627, %v1170
  %v1629 = vpop.permute.xlu0 %1628
  %1632 = vset.pattern.permute.xlu0 0
  %1633 = vperm.xlu0 %1632, %v1171
  %v1634 = vpop.permute.xlu0 %1633
  %1637 = vset.pattern.permute.xlu0 0
  %1638 = vperm.xlu0 %1637, %v1172
  %v1639 = vpop.permute.xlu0 %1638
  %1642 = vset.pattern.permute.xlu0 0
  %1643 = vperm.xlu0 %1642, %v1173
  %v1644 = vpop.permute.xlu0 %1643
  %1647 = vset.pattern.permute.xlu0 0
  %1648 = vperm.xlu0 %1647, %v1174
  %v1649 = vpop.permute.xlu0 %1648
  %1652 = vset.pattern.permute.xlu0 0
  %1653 = vperm.xlu0 %1652, %v1175
  %v1654 = vpop.permute.xlu0 %1653
  %v1752 = vunpack.c.l.b16 %v968
  %v1753 = vunpack.c.l.b16 %v969
  %v1754 = vunpack.c.l.b16 %v970
  %v1755 = vunpack.c.l.b16 %v971
  %v1756 = vunpack.c.l.b16 %v972
  %v1757 = vunpack.c.l.b16 %v973
  %v1758 = vunpack.c.l.b16 %v974
  %v1759 = vunpack.c.l.b16 %v975
  %v1760 = vunpack.c.l.b16 %v976
  %v1761 = vunpack.c.l.b16 %v977
  %v1762 = vunpack.c.l.b16 %v978
  %v1763 = vunpack.c.l.b16 %v979
  %v1764 = vunpack.c.l.b16 %v980
  %v1765 = vunpack.c.l.b16 %v981
  %v1766 = vunpack.c.l.b16 %v982
  %v1767 = vunpack.c.l.b16 %v983
  %v1768 = vunpack.c.l.b16 %v984
  %v1769 = vunpack.c.l.b16 %v985
  %v1770 = vunpack.c.l.b16 %v986
  %v1771 = vunpack.c.l.b16 %v987
  %v1772 = vunpack.c.l.b16 %v988
  %v1773 = vunpack.c.l.b16 %v989
  %v1774 = vunpack.c.l.b16 %v990
  %v1775 = vunpack.c.l.b16 %v991
  %v1776 = vunpack.c.l.b16 %v992
  %v1777 = vunpack.c.l.b16 %v993
  %v1778 = vunpack.c.l.b16 %v994
  %v1779 = vunpack.c.l.b16 %v995
  %v1780 = vunpack.c.l.b16 %v996
  %v1781 = vunpack.c.l.b16 %v997
  %v1782 = vunpack.c.l.b16 %v998
  %v1783 = vunpack.c.l.b16 %v999
  %v1784 = vunpack.c.l.b16 %v1000
  %v1785 = vunpack.c.l.b16 %v1001
  %v1786 = vunpack.c.l.b16 %v1002
  %v1787 = vunpack.c.l.b16 %v1003
  %v1788 = vunpack.c.l.b16 %v1004
  %v1789 = vunpack.c.l.b16 %v1005
  %v1790 = vunpack.c.l.b16 %v1006
  %v1791 = vunpack.c.l.b16 %v1007
  %v1792 = vunpack.c.l.b16 %v1008
  %v1793 = vunpack.c.l.b16 %v1009
  %v1794 = vunpack.c.l.b16 %v1010
  %v1795 = vunpack.c.l.b16 %v1011
  %v1796 = vunpack.c.l.b16 %v1012
  %v1797 = vunpack.c.l.b16 %v1013
  %v1798 = vunpack.c.l.b16 %v1014
  %v1799 = vunpack.c.l.b16 %v1015
  %v1800 = vunpack.c.l.b16 %v1016
  %v1801 = vunpack.c.l.b16 %v1017
  %v1802 = vunpack.c.l.b16 %v1018
  %v1803 = vunpack.c.l.b16 %v1019
  %v1804 = vunpack.c.l.b16 %v1020
  %v1805 = vunpack.c.l.b16 %v1021
  %v1806 = vunpack.c.l.b16 %v1022
  %v1807 = vunpack.c.l.b16 %v1023
  %v1808 = vunpack.c.l.b16 %v1024
  %v1809 = vunpack.c.l.b16 %v1025
  %v1810 = vunpack.c.l.b16 %v1026
  %v1811 = vunpack.c.l.b16 %v1027
  %v1812 = vunpack.c.l.b16 %v1028
  %v1813 = vunpack.c.l.b16 %v1029
  %v1814 = vunpack.c.l.b16 %v1030
  %v1815 = vunpack.c.l.b16 %v1031
  %v1816 = vunpack.c.l.b16 %v1032
  %v1817 = vunpack.c.l.b16 %v1033
  %v1818 = vunpack.c.l.b16 %v1034
  %v1819 = vunpack.c.l.b16 %v1035
  %v1820 = vunpack.c.l.b16 %v1036
  %v1821 = vunpack.c.l.b16 %v1037
  %v1822 = vunpack.c.l.b16 %v1038
  %v1823 = vunpack.c.l.b16 %v1039
  %v1824 = vunpack.c.l.b16 %v1040
  %v1825 = vunpack.c.l.b16 %v1041
  %v1826 = vunpack.c.l.b16 %v1042
  %v1827 = vunpack.c.l.b16 %v1043
  %v1828 = vunpack.c.l.b16 %v1044
  %v1829 = vunpack.c.l.b16 %v1045
  %v1830 = vunpack.c.l.b16 %v1046
  %v1831 = vunpack.c.l.b16 %v1047
  %v1832 = vunpack.c.l.b16 %v1048
  %v1833 = vunpack.c.l.b16 %v1049
  %v1834 = vunpack.c.l.b16 %v1050
  %v1835 = vunpack.c.l.b16 %v1051
  %v1836 = vunpack.c.l.b16 %v1052
  %v1837 = vunpack.c.l.b16 %v1053
  %v1838 = vunpack.c.l.b16 %v1054
  %v1839 = vunpack.c.l.b16 %v1055
  %v1840 = vunpack.c.l.b16 %v1056
  %v1841 = vunpack.c.l.b16 %v1057
  %v1842 = vunpack.c.l.b16 %v1058
  %v1843 = vunpack.c.l.b16 %v1059
  %v1844 = vunpack.c.l.b16 %v1060
  %v1845 = vunpack.c.l.b16 %v1061
  %v1846 = vunpack.c.l.b16 %v1062
  %v1847 = vunpack.c.l.b16 %v1063
  %v1848 = vpack.c.b16 %v1753, %v1752
  %v1849 = vpack.c.b16 %v1755, %v1754
  %v1850 = vpack.c.b16 %v1757, %v1756
  %v1851 = vpack.c.b16 %v1759, %v1758
  %v1852 = vpack.c.b16 %v1761, %v1760
  %v1853 = vpack.c.b16 %v1763, %v1762
  %v1854 = vpack.c.b16 %v1765, %v1764
  %v1855 = vpack.c.b16 %v1767, %v1766
  %v1856 = vpack.c.b16 %v1769, %v1768
  %v1857 = vpack.c.b16 %v1771, %v1770
  %v1858 = vpack.c.b16 %v1773, %v1772
  %v1859 = vpack.c.b16 %v1775, %v1774
  %v1860 = vpack.c.b16 %v1777, %v1776
  %v1861 = vpack.c.b16 %v1779, %v1778
  %v1862 = vpack.c.b16 %v1781, %v1780
  %v1863 = vpack.c.b16 %v1783, %v1782
  %v1864 = vpack.c.b16 %v1785, %v1784
  %v1865 = vpack.c.b16 %v1787, %v1786
  %v1866 = vpack.c.b16 %v1789, %v1788
  %v1867 = vpack.c.b16 %v1791, %v1790
  %v1868 = vpack.c.b16 %v1793, %v1792
  %v1869 = vpack.c.b16 %v1795, %v1794
  %v1870 = vpack.c.b16 %v1797, %v1796
  %v1871 = vpack.c.b16 %v1799, %v1798
  %v1872 = vpack.c.b16 %v1801, %v1800
  %v1873 = vpack.c.b16 %v1803, %v1802
  %v1874 = vpack.c.b16 %v1805, %v1804
  %v1875 = vpack.c.b16 %v1807, %v1806
  %v1876 = vpack.c.b16 %v1809, %v1808
  %v1877 = vpack.c.b16 %v1811, %v1810
  %v1878 = vpack.c.b16 %v1813, %v1812
  %v1879 = vpack.c.b16 %v1815, %v1814
  %v1880 = vpack.c.b16 %v1817, %v1816
  %v1881 = vpack.c.b16 %v1819, %v1818
  %v1882 = vpack.c.b16 %v1821, %v1820
  %v1883 = vpack.c.b16 %v1823, %v1822
  %v1884 = vpack.c.b16 %v1825, %v1824
  %v1885 = vpack.c.b16 %v1827, %v1826
  %v1886 = vpack.c.b16 %v1829, %v1828
  %v1887 = vpack.c.b16 %v1831, %v1830
  %v1888 = vpack.c.b16 %v1833, %v1832
  %v1889 = vpack.c.b16 %v1835, %v1834
  %v1890 = vpack.c.b16 %v1837, %v1836
  %v1891 = vpack.c.b16 %v1839, %v1838
  %v1892 = vpack.c.b16 %v1841, %v1840
  %v1893 = vpack.c.b16 %v1843, %v1842
  %v1894 = vpack.c.b16 %v1845, %v1844
  %v1895 = vpack.c.b16 %v1847, %v1846
  %1944 = vmatprep.subr.bf16.mxu0 %v1079
  %1945 = vmatpush1.bf16.msra.mxu0 %v1078
  %1946 = vmatprep.subr.bf16.mxu0 %v1077
  %1947 = vmatpush1.bf16.msra.mxu0 %v1076
  %1948 = vmatprep.subr.bf16.mxu0 %v1075
  %1949 = vmatpush1.bf16.msra.mxu0 %v1074
  %1950 = vmatprep.subr.bf16.mxu0 %v1073
  %1951 = vmatpush1.bf16.msra.mxu0 %v1072
  %1952 = vmatprep.subr.bf16.mxu0 %v1071
  %1953 = vmatpush1.bf16.msra.mxu0 %v1070
  %1954 = vmatprep.subr.bf16.mxu0 %v1069
  %1955 = vmatpush1.bf16.msra.mxu0 %v1068
  %1956 = vmatprep.subr.bf16.mxu0 %v1067
  %1957 = vmatpush1.bf16.msra.mxu0 %v1066
  %1958 = vmatprep.subr.bf16.mxu0 %v1065
  %1959 = vmatpush1.bf16.msra.mxu0 %v1064
  %1960 = vmatprep.subr.bf16.mxu0 0
  %1961 = vmatpush2.bf16.msra.mxu0 0
  %1962 = vmatprep.subr.bf16.mxu0 0
  %1963 = vmatpush2.bf16.msra.mxu0 0
  %1964 = vmatprep.subr.bf16.mxu0 0
  %1965 = vmatpush2.bf16.msra.mxu0 0
  %1966 = vmatprep.subr.bf16.mxu0 0
  %1967 = vmatpush2.bf16.msra.mxu0 0
  %1968 = vmatprep.subr.bf16.mxu0 0
  %1969 = vmatpush2.bf16.msra.mxu0 0
  %1970 = vmatprep.subr.bf16.mxu0 0
  %1971 = vmatpush2.bf16.msra.mxu0 0
  %1972 = vmatprep.subr.bf16.mxu0 0
  %1973 = vmatpush2.bf16.msra.mxu0 0
  %1974 = vmatprep.subr.bf16.mxu0 0
  %1975 = vmatpush2.bf16.msra.mxu0 0
  %1976 = vmatprep.mubr.bf16.mxu0 0
  %1977 = vmatmul.mubr.bf16.gmra.mxu0 %v1848
  %v1978 = vpop.f32.mrf.mxu0
  %v1979 = vadd.f32 %v1179, %v1978
  %v1980 = vpop.f32.mrf.mxu0
  %v1981 = vadd.f32 %v1179, %v1980
  %v1982 = vpop.f32.mrf.mxu0
  %v1983 = vadd.f32 %v1184, %v1982
  %v1984 = vpop.f32.mrf.mxu0
  %v1985 = vadd.f32 %v1184, %v1984
  %1986 = vmatprep.mubr.bf16.mxu0 0
  %1987 = vmatmul.mubr.bf16.gmra.mxu0 %v1849
  %v1988 = vpop.f32.mrf.mxu0
  %v1989 = vadd.f32 %v1189, %v1988
  %v1990 = vpop.f32.mrf.mxu0
  %v1991 = vadd.f32 %v1189, %v1990
  %v1992 = vpop.f32.mrf.mxu0
  %v1993 = vadd.f32 %v1194, %v1992
  %v1994 = vpop.f32.mrf.mxu0
  %v1995 = vadd.f32 %v1194, %v1994
  %1996 = vmatprep.mubr.bf16.mxu0 0
  %1997 = vmatmul.mubr.bf16.gmra.mxu0 %v1850
  %v1998 = vpop.f32.mrf.mxu0
  %v1999 = vadd.f32 %v1199, %v1998
  %v2000 = vpop.f32.mrf.mxu0
  %v2001 = vadd.f32 %v1199, %v2000
  %v2002 = vpop.f32.mrf.mxu0
  %v2003 = vadd.f32 %v1204, %v2002
  %v2004 = vpop.f32.mrf.mxu0
  %v2005 = vadd.f32 %v1204, %v2004
  %2006 = vmatprep.mubr.bf16.mxu0 0
  %2007 = vmatmul.mubr.bf16.gmra.mxu0 %v1851
  %v2008 = vpop.f32.mrf.mxu0
  %v2009 = vadd.f32 %v1209, %v2008
  %v2010 = vpop.f32.mrf.mxu0
  %v2011 = vadd.f32 %v1209, %v2010
  %v2012 = vpop.f32.mrf.mxu0
  %v2013 = vadd.f32 %v1214, %v2012
  %v2014 = vpop.f32.mrf.mxu0
  %v2015 = vadd.f32 %v1214, %v2014
  %2016 = vmatprep.mubr.bf16.mxu0 0
  %2017 = vmatmul.mubr.bf16.gmra.mxu0 %v1852
  %v2018 = vpop.f32.mrf.mxu0
  %v2019 = vadd.f32 %v1219, %v2018
  %v2020 = vpop.f32.mrf.mxu0
  %v2021 = vadd.f32 %v1219, %v2020
  %v2022 = vpop.f32.mrf.mxu0
  %v2023 = vadd.f32 %v1224, %v2022
  %v2024 = vpop.f32.mrf.mxu0
  %v2025 = vadd.f32 %v1224, %v2024
  %2026 = vmatprep.mubr.bf16.mxu0 0
  %2027 = vmatmul.mubr.bf16.gmra.mxu0 %v1853
  %v2028 = vpop.f32.mrf.mxu0
  %v2029 = vadd.f32 %v1229, %v2028
  %v2030 = vpop.f32.mrf.mxu0
  %v2031 = vadd.f32 %v1229, %v2030
  %v2032 = vpop.f32.mrf.mxu0
  %v2033 = vadd.f32 %v1234, %v2032
  %v2034 = vpop.f32.mrf.mxu0
  %v2035 = vadd.f32 %v1234, %v2034
  %2036 = vmatprep.mubr.bf16.mxu0 0
  %2037 = vmatmul.mubr.bf16.gmra.mxu0 %v1854
  %v2038 = vpop.f32.mrf.mxu0
  %v2039 = vadd.f32 %v1239, %v2038
  %v2040 = vpop.f32.mrf.mxu0
  %v2041 = vadd.f32 %v1239, %v2040
  %v2042 = vpop.f32.mrf.mxu0
  %v2043 = vadd.f32 %v1244, %v2042
  %v2044 = vpop.f32.mrf.mxu0
  %v2045 = vadd.f32 %v1244, %v2044
  %2046 = vmatprep.mubr.bf16.mxu0 0
  %2047 = vmatmul.mubr.bf16.gmra.mxu0 %v1855
  %v2048 = vpop.f32.mrf.mxu0
  %v2049 = vadd.f32 %v1249, %v2048
  %v2050 = vpop.f32.mrf.mxu0
  %v2051 = vadd.f32 %v1249, %v2050
  %v2052 = vpop.f32.mrf.mxu0
  %v2053 = vadd.f32 %v1254, %v2052
  %v2054 = vpop.f32.mrf.mxu0
  %v2055 = vadd.f32 %v1254, %v2054
  %2056 = vmatprep.mubr.bf16.mxu0 0
  %2057 = vmatmul.mubr.bf16.gmra.mxu0 %v1856
  %v2058 = vpop.f32.mrf.mxu0
  %v2059 = vadd.f32 %v1259, %v2058
  %v2060 = vpop.f32.mrf.mxu0
  %v2061 = vadd.f32 %v1259, %v2060
  %v2062 = vpop.f32.mrf.mxu0
  %v2063 = vadd.f32 %v1264, %v2062
  %v2064 = vpop.f32.mrf.mxu0
  %v2065 = vadd.f32 %v1264, %v2064
  %2066 = vmatprep.mubr.bf16.mxu0 0
  %2067 = vmatmul.mubr.bf16.gmra.mxu0 %v1857
  %v2068 = vpop.f32.mrf.mxu0
  %v2069 = vadd.f32 %v1269, %v2068
  %v2070 = vpop.f32.mrf.mxu0
  %v2071 = vadd.f32 %v1269, %v2070
  %v2072 = vpop.f32.mrf.mxu0
  %v2073 = vadd.f32 %v1274, %v2072
  %v2074 = vpop.f32.mrf.mxu0
  %v2075 = vadd.f32 %v1274, %v2074
  %2076 = vmatprep.mubr.bf16.mxu0 0
  %2077 = vmatmul.mubr.bf16.gmra.mxu0 %v1858
  %v2078 = vpop.f32.mrf.mxu0
  %v2079 = vadd.f32 %v1279, %v2078
  %v2080 = vpop.f32.mrf.mxu0
  %v2081 = vadd.f32 %v1279, %v2080
  %v2082 = vpop.f32.mrf.mxu0
  %v2083 = vadd.f32 %v1284, %v2082
  %v2084 = vpop.f32.mrf.mxu0
  %v2085 = vadd.f32 %v1284, %v2084
  %2086 = vmatprep.mubr.bf16.mxu0 0
  %2087 = vmatmul.mubr.bf16.gmra.mxu0 %v1859
  %v2088 = vpop.f32.mrf.mxu0
  %v2089 = vadd.f32 %v1289, %v2088
  %v2090 = vpop.f32.mrf.mxu0
  %v2091 = vadd.f32 %v1289, %v2090
  %v2092 = vpop.f32.mrf.mxu0
  %v2093 = vadd.f32 %v1294, %v2092
  %v2094 = vpop.f32.mrf.mxu0
  %v2095 = vadd.f32 %v1294, %v2094
  %2096 = vmatprep.mubr.bf16.mxu0 0
  %2097 = vmatmul.mubr.bf16.gmra.mxu0 %v1860
  %v2098 = vpop.f32.mrf.mxu0
  %v2099 = vadd.f32 %v1299, %v2098
  %v2100 = vpop.f32.mrf.mxu0
  %v2101 = vadd.f32 %v1299, %v2100
  %v2102 = vpop.f32.mrf.mxu0
  %v2103 = vadd.f32 %v1304, %v2102
  %v2104 = vpop.f32.mrf.mxu0
  %v2105 = vadd.f32 %v1304, %v2104
  %2106 = vmatprep.mubr.bf16.mxu0 0
  %2107 = vmatmul.mubr.bf16.gmra.mxu0 %v1861
  %v2108 = vpop.f32.mrf.mxu0
  %v2109 = vadd.f32 %v1309, %v2108
  %v2110 = vpop.f32.mrf.mxu0
  %v2111 = vadd.f32 %v1309, %v2110
  %v2112 = vpop.f32.mrf.mxu0
  %v2113 = vadd.f32 %v1314, %v2112
  %v2114 = vpop.f32.mrf.mxu0
  %v2115 = vadd.f32 %v1314, %v2114
  %2116 = vmatprep.mubr.bf16.mxu0 0
  %2117 = vmatmul.mubr.bf16.gmra.mxu0 %v1862
  %v2118 = vpop.f32.mrf.mxu0
  %v2119 = vadd.f32 %v1319, %v2118
  %v2120 = vpop.f32.mrf.mxu0
  %v2121 = vadd.f32 %v1319, %v2120
  %v2122 = vpop.f32.mrf.mxu0
  %v2123 = vadd.f32 %v1324, %v2122
  %v2124 = vpop.f32.mrf.mxu0
  %v2125 = vadd.f32 %v1324, %v2124
  %2126 = vmatprep.mubr.bf16.mxu0 0
  %2127 = vmatmul.mubr.bf16.gmra.mxu0 %v1863
  %v2128 = vpop.f32.mrf.mxu0
  %v2129 = vadd.f32 %v1329, %v2128
  %v2130 = vpop.f32.mrf.mxu0
  %v2131 = vadd.f32 %v1329, %v2130
  %v2132 = vpop.f32.mrf.mxu0
  %v2133 = vadd.f32 %v1334, %v2132
  %v2134 = vpop.f32.mrf.mxu0
  %v2135 = vadd.f32 %v1334, %v2134
  %2136 = vmatprep.mubr.bf16.mxu0 0
  %2137 = vmatmul.mubr.bf16.gmra.mxu0 %v1864
  %v2138 = vpop.f32.mrf.mxu0
  %v2139 = vadd.f32 %v1339, %v2138
  %v2140 = vpop.f32.mrf.mxu0
  %v2141 = vadd.f32 %v1339, %v2140
  %v2142 = vpop.f32.mrf.mxu0
  %v2143 = vadd.f32 %v1344, %v2142
  %v2144 = vpop.f32.mrf.mxu0
  %v2145 = vadd.f32 %v1344, %v2144
  %2146 = vmatprep.mubr.bf16.mxu0 0
  %2147 = vmatmul.mubr.bf16.gmra.mxu0 %v1865
  %v2148 = vpop.f32.mrf.mxu0
  %v2149 = vadd.f32 %v1349, %v2148
  %v2150 = vpop.f32.mrf.mxu0
  %v2151 = vadd.f32 %v1349, %v2150
  %v2152 = vpop.f32.mrf.mxu0
  %v2153 = vadd.f32 %v1354, %v2152
  %v2154 = vpop.f32.mrf.mxu0
  %v2155 = vadd.f32 %v1354, %v2154
  %2156 = vmatprep.mubr.bf16.mxu0 0
  %2157 = vmatmul.mubr.bf16.gmra.mxu0 %v1866
  %v2158 = vpop.f32.mrf.mxu0
  %v2159 = vadd.f32 %v1359, %v2158
  %v2160 = vpop.f32.mrf.mxu0
  %v2161 = vadd.f32 %v1359, %v2160
  %v2162 = vpop.f32.mrf.mxu0
  %v2163 = vadd.f32 %v1364, %v2162
  %v2164 = vpop.f32.mrf.mxu0
  %v2165 = vadd.f32 %v1364, %v2164
  %2166 = vmatprep.mubr.bf16.mxu0 0
  %2167 = vmatmul.mubr.bf16.gmra.mxu0 %v1867
  %v2168 = vpop.f32.mrf.mxu0
  %v2169 = vadd.f32 %v1369, %v2168
  %v2170 = vpop.f32.mrf.mxu0
  %v2171 = vadd.f32 %v1369, %v2170
  %v2172 = vpop.f32.mrf.mxu0
  %v2173 = vadd.f32 %v1374, %v2172
  %v2174 = vpop.f32.mrf.mxu0
  %v2175 = vadd.f32 %v1374, %v2174
  %2176 = vmatprep.mubr.bf16.mxu0 0
  %2177 = vmatmul.mubr.bf16.gmra.mxu0 %v1868
  %v2178 = vpop.f32.mrf.mxu0
  %v2179 = vadd.f32 %v1379, %v2178
  %v2180 = vpop.f32.mrf.mxu0
  %v2181 = vadd.f32 %v1379, %v2180
  %v2182 = vpop.f32.mrf.mxu0
  %v2183 = vadd.f32 %v1384, %v2182
  %v2184 = vpop.f32.mrf.mxu0
  %v2185 = vadd.f32 %v1384, %v2184
  %2186 = vmatprep.mubr.bf16.mxu0 0
  %2187 = vmatmul.mubr.bf16.gmra.mxu0 %v1869
  %v2188 = vpop.f32.mrf.mxu0
  %v2189 = vadd.f32 %v1389, %v2188
  %v2190 = vpop.f32.mrf.mxu0
  %v2191 = vadd.f32 %v1389, %v2190
  %v2192 = vpop.f32.mrf.mxu0
  %v2193 = vadd.f32 %v1394, %v2192
  %v2194 = vpop.f32.mrf.mxu0
  %v2195 = vadd.f32 %v1394, %v2194
  %2196 = vmatprep.mubr.bf16.mxu0 0
  %2197 = vmatmul.mubr.bf16.gmra.mxu0 %v1870
  %v2198 = vpop.f32.mrf.mxu0
  %v2199 = vadd.f32 %v1399, %v2198
  %v2200 = vpop.f32.mrf.mxu0
  %v2201 = vadd.f32 %v1399, %v2200
  %v2202 = vpop.f32.mrf.mxu0
  %v2203 = vadd.f32 %v1404, %v2202
  %v2204 = vpop.f32.mrf.mxu0
  %v2205 = vadd.f32 %v1404, %v2204
  %2206 = vmatprep.mubr.bf16.mxu0 0
  %2207 = vmatmul.mubr.bf16.gmra.mxu0 %v1871
  %v2208 = vpop.f32.mrf.mxu0
  %v2209 = vadd.f32 %v1409, %v2208
  %v2210 = vpop.f32.mrf.mxu0
  %v2211 = vadd.f32 %v1409, %v2210
  %v2212 = vpop.f32.mrf.mxu0
  %v2213 = vadd.f32 %v1414, %v2212
  %v2214 = vpop.f32.mrf.mxu0
  %v2215 = vadd.f32 %v1414, %v2214
  %2216 = vmatprep.mubr.bf16.mxu0 0
  %2217 = vmatmul.mubr.bf16.gmra.mxu0 %v1872
  %v2218 = vpop.f32.mrf.mxu0
  %v2219 = vadd.f32 %v1419, %v2218
  %v2220 = vpop.f32.mrf.mxu0
  %v2221 = vadd.f32 %v1419, %v2220
  %v2222 = vpop.f32.mrf.mxu0
  %v2223 = vadd.f32 %v1424, %v2222
  %v2224 = vpop.f32.mrf.mxu0
  %v2225 = vadd.f32 %v1424, %v2224
  %2226 = vmatprep.mubr.bf16.mxu0 0
  %2227 = vmatmul.mubr.bf16.gmra.mxu0 %v1873
  %v2228 = vpop.f32.mrf.mxu0
  %v2229 = vadd.f32 %v1429, %v2228
  %v2230 = vpop.f32.mrf.mxu0
  %v2231 = vadd.f32 %v1429, %v2230
  %v2232 = vpop.f32.mrf.mxu0
  %v2233 = vadd.f32 %v1434, %v2232
  %v2234 = vpop.f32.mrf.mxu0
  %v2235 = vadd.f32 %v1434, %v2234
  %2236 = vmatprep.mubr.bf16.mxu0 0
  %2237 = vmatmul.mubr.bf16.gmra.mxu0 %v1874
  %v2238 = vpop.f32.mrf.mxu0
  %v2239 = vadd.f32 %v1439, %v2238
  %v2240 = vpop.f32.mrf.mxu0
  %v2241 = vadd.f32 %v1439, %v2240
  %v2242 = vpop.f32.mrf.mxu0
  %v2243 = vadd.f32 %v1444, %v2242
  %v2244 = vpop.f32.mrf.mxu0
  %v2245 = vadd.f32 %v1444, %v2244
  %2246 = vmatprep.mubr.bf16.mxu0 0
  %2247 = vmatmul.mubr.bf16.gmra.mxu0 %v1875
  %v2248 = vpop.f32.mrf.mxu0
  %v2249 = vadd.f32 %v1449, %v2248
  %v2250 = vpop.f32.mrf.mxu0
  %v2251 = vadd.f32 %v1449, %v2250
  %v2252 = vpop.f32.mrf.mxu0
  %v2253 = vadd.f32 %v1454, %v2252
  %v2254 = vpop.f32.mrf.mxu0
  %v2255 = vadd.f32 %v1454, %v2254
  %2256 = vmatprep.mubr.bf16.mxu0 0
  %2257 = vmatmul.mubr.bf16.gmra.mxu0 %v1876
  %v2258 = vpop.f32.mrf.mxu0
  %v2259 = vadd.f32 %v1459, %v2258
  %v2260 = vpop.f32.mrf.mxu0
  %v2261 = vadd.f32 %v1459, %v2260
  %v2262 = vpop.f32.mrf.mxu0
  %v2263 = vadd.f32 %v1464, %v2262
  %v2264 = vpop.f32.mrf.mxu0
  %v2265 = vadd.f32 %v1464, %v2264
  %2266 = vmatprep.mubr.bf16.mxu0 0
  %2267 = vmatmul.mubr.bf16.gmra.mxu0 %v1877
  %v2268 = vpop.f32.mrf.mxu0
  %v2269 = vadd.f32 %v1469, %v2268
  %v2270 = vpop.f32.mrf.mxu0
  %v2271 = vadd.f32 %v1469, %v2270
  %v2272 = vpop.f32.mrf.mxu0
  %v2273 = vadd.f32 %v1474, %v2272
  %v2274 = vpop.f32.mrf.mxu0
  %v2275 = vadd.f32 %v1474, %v2274
  %2276 = vmatprep.mubr.bf16.mxu0 0
  %2277 = vmatmul.mubr.bf16.gmra.mxu0 %v1878
  %v2278 = vpop.f32.mrf.mxu0
  %v2279 = vadd.f32 %v1479, %v2278
  %v2280 = vpop.f32.mrf.mxu0
  %v2281 = vadd.f32 %v1479, %v2280
  %v2282 = vpop.f32.mrf.mxu0
  %v2283 = vadd.f32 %v1484, %v2282
  %v2284 = vpop.f32.mrf.mxu0
  %v2285 = vadd.f32 %v1484, %v2284
  %2286 = vmatprep.mubr.bf16.mxu0 0
  %2287 = vmatmul.mubr.bf16.gmra.mxu0 %v1879
  %v2288 = vpop.f32.mrf.mxu0
  %v2289 = vadd.f32 %v1489, %v2288
  %v2290 = vpop.f32.mrf.mxu0
  %v2291 = vadd.f32 %v1489, %v2290
  %v2292 = vpop.f32.mrf.mxu0
  %v2293 = vadd.f32 %v1494, %v2292
  %v2294 = vpop.f32.mrf.mxu0
  %v2295 = vadd.f32 %v1494, %v2294
  %2296 = vmatprep.mubr.bf16.mxu0 0
  %2297 = vmatmul.mubr.bf16.gmra.mxu0 %v1880
  %v2298 = vpop.f32.mrf.mxu0
  %v2299 = vadd.f32 %v1499, %v2298
  %v2300 = vpop.f32.mrf.mxu0
  %v2301 = vadd.f32 %v1499, %v2300
  %v2302 = vpop.f32.mrf.mxu0
  %v2303 = vadd.f32 %v1504, %v2302
  %v2304 = vpop.f32.mrf.mxu0
  %v2305 = vadd.f32 %v1504, %v2304
  %2306 = vmatprep.mubr.bf16.mxu0 0
  %2307 = vmatmul.mubr.bf16.gmra.mxu0 %v1881
  %v2308 = vpop.f32.mrf.mxu0
  %v2309 = vadd.f32 %v1509, %v2308
  %v2310 = vpop.f32.mrf.mxu0
  %v2311 = vadd.f32 %v1509, %v2310
  %v2312 = vpop.f32.mrf.mxu0
  %v2313 = vadd.f32 %v1514, %v2312
  %v2314 = vpop.f32.mrf.mxu0
  %v2315 = vadd.f32 %v1514, %v2314
  %2316 = vmatprep.mubr.bf16.mxu0 0
  %2317 = vmatmul.mubr.bf16.gmra.mxu0 %v1882
  %v2318 = vpop.f32.mrf.mxu0
  %v2319 = vadd.f32 %v1519, %v2318
  %v2320 = vpop.f32.mrf.mxu0
  %v2321 = vadd.f32 %v1519, %v2320
  %v2322 = vpop.f32.mrf.mxu0
  %v2323 = vadd.f32 %v1524, %v2322
  %v2324 = vpop.f32.mrf.mxu0
  %v2325 = vadd.f32 %v1524, %v2324
  %2326 = vmatprep.mubr.bf16.mxu0 0
  %2327 = vmatmul.mubr.bf16.gmra.mxu0 %v1883
  %v2328 = vpop.f32.mrf.mxu0
  %v2329 = vadd.f32 %v1529, %v2328
  %v2330 = vpop.f32.mrf.mxu0
  %v2331 = vadd.f32 %v1529, %v2330
  %v2332 = vpop.f32.mrf.mxu0
  %v2333 = vadd.f32 %v1534, %v2332
  %v2334 = vpop.f32.mrf.mxu0
  %v2335 = vadd.f32 %v1534, %v2334
  %2336 = vmatprep.mubr.bf16.mxu0 0
  %2337 = vmatmul.mubr.bf16.gmra.mxu0 %v1884
  %v2338 = vpop.f32.mrf.mxu0
  %v2339 = vadd.f32 %v1539, %v2338
  %v2340 = vpop.f32.mrf.mxu0
  %v2341 = vadd.f32 %v1539, %v2340
  %v2342 = vpop.f32.mrf.mxu0
  %v2343 = vadd.f32 %v1544, %v2342
  %v2344 = vpop.f32.mrf.mxu0
  %v2345 = vadd.f32 %v1544, %v2344
  %2346 = vmatprep.mubr.bf16.mxu0 0
  %2347 = vmatmul.mubr.bf16.gmra.mxu0 %v1885
  %v2348 = vpop.f32.mrf.mxu0
  %v2349 = vadd.f32 %v1549, %v2348
  %v2350 = vpop.f32.mrf.mxu0
  %v2351 = vadd.f32 %v1549, %v2350
  %v2352 = vpop.f32.mrf.mxu0
  %v2353 = vadd.f32 %v1554, %v2352
  %v2354 = vpop.f32.mrf.mxu0
  %v2355 = vadd.f32 %v1554, %v2354
  %2356 = vmatprep.mubr.bf16.mxu0 0
  %2357 = vmatmul.mubr.bf16.gmra.mxu0 %v1886
  %v2358 = vpop.f32.mrf.mxu0
  %v2359 = vadd.f32 %v1559, %v2358
  %v2360 = vpop.f32.mrf.mxu0
  %v2361 = vadd.f32 %v1559, %v2360
  %v2362 = vpop.f32.mrf.mxu0
  %v2363 = vadd.f32 %v1564, %v2362
  %v2364 = vpop.f32.mrf.mxu0
  %v2365 = vadd.f32 %v1564, %v2364
  %2366 = vmatprep.mubr.bf16.mxu0 0
  %2367 = vmatmul.mubr.bf16.gmra.mxu0 %v1887
  %v2368 = vpop.f32.mrf.mxu0
  %v2369 = vadd.f32 %v1569, %v2368
  %v2370 = vpop.f32.mrf.mxu0
  %v2371 = vadd.f32 %v1569, %v2370
  %v2372 = vpop.f32.mrf.mxu0
  %v2373 = vadd.f32 %v1574, %v2372
  %v2374 = vpop.f32.mrf.mxu0
  %v2375 = vadd.f32 %v1574, %v2374
  %2376 = vmatprep.mubr.bf16.mxu0 0
  %2377 = vmatmul.mubr.bf16.gmra.mxu0 %v1888
  %v2378 = vpop.f32.mrf.mxu0
  %v2379 = vadd.f32 %v1579, %v2378
  %v2380 = vpop.f32.mrf.mxu0
  %v2381 = vadd.f32 %v1579, %v2380
  %v2382 = vpop.f32.mrf.mxu0
  %v2383 = vadd.f32 %v1584, %v2382
  %v2384 = vpop.f32.mrf.mxu0
  %v2385 = vadd.f32 %v1584, %v2384
  %2386 = vmatprep.mubr.bf16.mxu0 0
  %2387 = vmatmul.mubr.bf16.gmra.mxu0 %v1889
  %v2388 = vpop.f32.mrf.mxu0
  %v2389 = vadd.f32 %v1589, %v2388
  %v2390 = vpop.f32.mrf.mxu0
  %v2391 = vadd.f32 %v1589, %v2390
  %v2392 = vpop.f32.mrf.mxu0
  %v2393 = vadd.f32 %v1594, %v2392
  %v2394 = vpop.f32.mrf.mxu0
  %v2395 = vadd.f32 %v1594, %v2394
  %2396 = vmatprep.mubr.bf16.mxu0 0
  %2397 = vmatmul.mubr.bf16.gmra.mxu0 %v1890
  %v2398 = vpop.f32.mrf.mxu0
  %v2399 = vadd.f32 %v1599, %v2398
  %v2400 = vpop.f32.mrf.mxu0
  %v2401 = vadd.f32 %v1599, %v2400
  %v2402 = vpop.f32.mrf.mxu0
  %v2403 = vadd.f32 %v1604, %v2402
  %v2404 = vpop.f32.mrf.mxu0
  %v2405 = vadd.f32 %v1604, %v2404
  %2406 = vmatprep.mubr.bf16.mxu0 0
  %2407 = vmatmul.mubr.bf16.gmra.mxu0 %v1891
  %v2408 = vpop.f32.mrf.mxu0
  %v2409 = vadd.f32 %v1609, %v2408
  %v2410 = vpop.f32.mrf.mxu0
  %v2411 = vadd.f32 %v1609, %v2410
  %v2412 = vpop.f32.mrf.mxu0
  %v2413 = vadd.f32 %v1614, %v2412
  %v2414 = vpop.f32.mrf.mxu0
  %v2415 = vadd.f32 %v1614, %v2414
  %2416 = vmatprep.mubr.bf16.mxu0 0
  %2417 = vmatmul.mubr.bf16.gmra.mxu0 %v1892
  %v2418 = vpop.f32.mrf.mxu0
  %v2419 = vadd.f32 %v1619, %v2418
  %v2420 = vpop.f32.mrf.mxu0
  %v2421 = vadd.f32 %v1619, %v2420
  %v2422 = vpop.f32.mrf.mxu0
  %v2423 = vadd.f32 %v1624, %v2422
  %v2424 = vpop.f32.mrf.mxu0
  %v2425 = vadd.f32 %v1624, %v2424
  %2426 = vmatprep.mubr.bf16.mxu0 0
  %2427 = vmatmul.mubr.bf16.gmra.mxu0 %v1893
  %v2428 = vpop.f32.mrf.mxu0
  %v2429 = vadd.f32 %v1629, %v2428
  %v2430 = vpop.f32.mrf.mxu0
  %v2431 = vadd.f32 %v1629, %v2430
  %v2432 = vpop.f32.mrf.mxu0
  %v2433 = vadd.f32 %v1634, %v2432
  %v2434 = vpop.f32.mrf.mxu0
  %v2435 = vadd.f32 %v1634, %v2434
  %2436 = vmatprep.mubr.bf16.mxu0 0
  %2437 = vmatmul.mubr.bf16.gmra.mxu0 %v1894
  %v2438 = vpop.f32.mrf.mxu0
  %v2439 = vadd.f32 %v1639, %v2438
  %v2440 = vpop.f32.mrf.mxu0
  %v2441 = vadd.f32 %v1639, %v2440
  %v2442 = vpop.f32.mrf.mxu0
  %v2443 = vadd.f32 %v1644, %v2442
  %v2444 = vpop.f32.mrf.mxu0
  %v2445 = vadd.f32 %v1644, %v2444
  %2446 = vmatprep.mubr.bf16.mxu0 0
  %2447 = vmatmul.mubr.bf16.gmra.mxu0 %v1895
  %v2448 = vpop.f32.mrf.mxu0
  %v2449 = vadd.f32 %v1649, %v2448
  %v2450 = vpop.f32.mrf.mxu0
  %v2451 = vadd.f32 %v1649, %v2450
  %v2452 = vpop.f32.mrf.mxu0
  %v2453 = vadd.f32 %v1654, %v2452
  %v2454 = vpop.f32.mrf.mxu0
  %v2455 = vadd.f32 %v1654, %v2454
  %2456 = vdwg.mxu0
  %2457 = vst [vmem:[%s5] sm:$0xff] %v1979
  %vm2458 = vcmask 556032
  %2459 = vst.msk [vmem:[%s5 + $0x8] sm:$0xff] %vm2458, %v1981
  %2460 = vst [vmem:[%s5 + $0x10] sm:$0xff] %v1983
  %2461 = vst.msk [vmem:[%s5 + $0x18] sm:$0xff] %vm2458, %v1985
  %2462 = vst [vmem:[%s5 + $0x20] sm:$0xff] %v1989
  %2463 = vst.msk [vmem:[%s5 + $0x28] sm:$0xff] %vm2458, %v1991
  %2464 = vst [vmem:[%s5 + $0x30] sm:$0xff] %v1993
  %2465 = vst.msk [vmem:[%s5 + $0x38] sm:$0xff] %vm2458, %v1995
  %2466 = vst [vmem:[%s5 + $0x40] sm:$0xff] %v1999
  %2467 = vst.msk [vmem:[%s5 + $0x48] sm:$0xff] %vm2458, %v2001
  %2468 = vst [vmem:[%s5 + $0x50] sm:$0xff] %v2003
  %2469 = vst.msk [vmem:[%s5 + $0x58] sm:$0xff] %vm2458, %v2005
  %2470 = vst [vmem:[%s5 + $0x60] sm:$0xff] %v2009
  %2471 = vst.msk [vmem:[%s5 + $0x68] sm:$0xff] %vm2458, %v2011
  %2472 = vst [vmem:[%s5 + $0x70] sm:$0xff] %v2013
  %2473 = vst.msk [vmem:[%s5 + $0x78] sm:$0xff] %vm2458, %v2015
  %2474 = vst [vmem:[%s5 + $0x80] sm:$0xff] %v2019
  %2475 = vst.msk [vmem:[%s5 + $0x88] sm:$0xff] %vm2458, %v2021
  %2476 = vst [vmem:[%s5 + $0x90] sm:$0xff] %v2023
  %2477 = vst.msk [vmem:[%s5 + $0x98] sm:$0xff] %vm2458, %v2025
  %2478 = vst [vmem:[%s5 + $0xa0] sm:$0xff] %v2029
  %2479 = vst.msk [vmem:[%s5 + $0xa8] sm:$0xff] %vm2458, %v2031
  %2480 = vst [vmem:[%s5 + $0xb0] sm:$0xff] %v2033
  %2481 = vst.msk [vmem:[%s5 + $0xb8] sm:$0xff] %vm2458, %v2035
  %2482 = vst [vmem:[%s5 + $0xc0] sm:$0xff] %v2039
  %2483 = vst.msk [vmem:[%s5 + $0xc8] sm:$0xff] %vm2458, %v2041
  %2484 = vst [vmem:[%s5 + $0xd0] sm:$0xff] %v2043
  %2485 = vst.msk [vmem:[%s5 + $0xd8] sm:$0xff] %vm2458, %v2045
  %2486 = vst [vmem:[%s5 + $0xe0] sm:$0xff] %v2049
  %2487 = vst.msk [vmem:[%s5 + $0xe8] sm:$0xff] %vm2458, %v2051
  %2488 = vst [vmem:[%s5 + $0xf0] sm:$0xff] %v2053
  %2489 = vst.msk [vmem:[%s5 + $0xf8] sm:$0xff] %vm2458, %v2055
  %2490 = vst [vmem:[%s5 + $0x100] sm:$0xff] %v2059
  %2491 = vst.msk [vmem:[%s5 + $0x108] sm:$0xff] %vm2458, %v2061
  %2492 = vst [vmem:[%s5 + $0x110] sm:$0xff] %v2063
  %2493 = vst.msk [vmem:[%s5 + $0x118] sm:$0xff] %vm2458, %v2065
  %2494 = vst [vmem:[%s5 + $0x120] sm:$0xff] %v2069
  %2495 = vst.msk [vmem:[%s5 + $0x128] sm:$0xff] %vm2458, %v2071
  %2496 = vst [vmem:[%s5 + $0x130] sm:$0xff] %v2073
  %2497 = vst.msk [vmem:[%s5 + $0x138] sm:$0xff] %vm2458, %v2075
  %2498 = vst [vmem:[%s5 + $0x140] sm:$0xff] %v2079
  %2499 = vst.msk [vmem:[%s5 + $0x148] sm:$0xff] %vm2458, %v2081
  %2500 = vst [vmem:[%s5 + $0x150] sm:$0xff] %v2083
  %2501 = vst.msk [vmem:[%s5 + $0x158] sm:$0xff] %vm2458, %v2085
  %2502 = vst [vmem:[%s5 + $0x160] sm:$0xff] %v2089
  %2503 = vst.msk [vmem:[%s5 + $0x168] sm:$0xff] %vm2458, %v2091
  %2504 = vst [vmem:[%s5 + $0x170] sm:$0xff] %v2093
  %2505 = vst.msk [vmem:[%s5 + $0x178] sm:$0xff] %vm2458, %v2095
  %2506 = vst [vmem:[%s5 + $0x180] sm:$0xff] %v2099
  %2507 = vst.msk [vmem:[%s5 + $0x188] sm:$0xff] %vm2458, %v2101
  %2508 = vst [vmem:[%s5 + $0x190] sm:$0xff] %v2103
  %2509 = vst.msk [vmem:[%s5 + $0x198] sm:$0xff] %vm2458, %v2105
  %2510 = vst [vmem:[%s5 + $0x1a0] sm:$0xff] %v2109
  %2511 = vst.msk [vmem:[%s5 + $0x1a8] sm:$0xff] %vm2458, %v2111
  %2512 = vst [vmem:[%s5 + $0x1b0] sm:$0xff] %v2113
  %2513 = vst.msk [vmem:[%s5 + $0x1b8] sm:$0xff] %vm2458, %v2115
  %2514 = vst [vmem:[%s5 + $0x1c0] sm:$0xff] %v2119
  %2515 = vst.msk [vmem:[%s5 + $0x1c8] sm:$0xff] %vm2458, %v2121
  %2516 = vst [vmem:[%s5 + $0x1d0] sm:$0xff] %v2123
  %2517 = vst.msk [vmem:[%s5 + $0x1d8] sm:$0xff] %vm2458, %v2125
  %2518 = vst [vmem:[%s5 + $0x1e0] sm:$0xff] %v2129
  %2519 = vst.msk [vmem:[%s5 + $0x1e8] sm:$0xff] %vm2458, %v2131
  %2520 = vst [vmem:[%s5 + $0x1f0] sm:$0xff] %v2133
  %2521 = vst.msk [vmem:[%s5 + $0x1f8] sm:$0xff] %vm2458, %v2135
  %2522 = vst [vmem:[%s5 + $0x200] sm:$0xff] %v2139
  %2523 = vst.msk [vmem:[%s5 + $0x208] sm:$0xff] %vm2458, %v2141
  %2524 = vst [vmem:[%s5 + $0x210] sm:$0xff] %v2143
  %2525 = vst.msk [vmem:[%s5 + $0x218] sm:$0xff] %vm2458, %v2145
  %2526 = vst [vmem:[%s5 + $0x220] sm:$0xff] %v2149
  %2527 = vst.msk [vmem:[%s5 + $0x228] sm:$0xff] %vm2458, %v2151
  %2528 = vst [vmem:[%s5 + $0x230] sm:$0xff] %v2153
  %2529 = vst.msk [vmem:[%s5 + $0x238] sm:$0xff] %vm2458, %v2155
  %2530 = vst [vmem:[%s5 + $0x240] sm:$0xff] %v2159
  %2531 = vst.msk [vmem:[%s5 + $0x248] sm:$0xff] %vm2458, %v2161
  %2532 = vst [vmem:[%s5 + $0x250] sm:$0xff] %v2163
  %2533 = vst.msk [vmem:[%s5 + $0x258] sm:$0xff] %vm2458, %v2165
  %2534 = vst [vmem:[%s5 + $0x260] sm:$0xff] %v2169
  %2535 = vst.msk [vmem:[%s5 + $0x268] sm:$0xff] %vm2458, %v2171
  %2536 = vst [vmem:[%s5 + $0x270] sm:$0xff] %v2173
  %2537 = vst.msk [vmem:[%s5 + $0x278] sm:$0xff] %vm2458, %v2175
  %2538 = vst [vmem:[%s5 + $0x280] sm:$0xff] %v2179
  %2539 = vst.msk [vmem:[%s5 + $0x288] sm:$0xff] %vm2458, %v2181
  %2540 = vst [vmem:[%s5 + $0x290] sm:$0xff] %v2183
  %2541 = vst.msk [vmem:[%s5 + $0x298] sm:$0xff] %vm2458, %v2185
  %2542 = vst [vmem:[%s5 + $0x2a0] sm:$0xff] %v2189
  %2543 = vst.msk [vmem:[%s5 + $0x2a8] sm:$0xff] %vm2458, %v2191
  %2544 = vst [vmem:[%s5 + $0x2b0] sm:$0xff] %v2193
  %2545 = vst.msk [vmem:[%s5 + $0x2b8] sm:$0xff] %vm2458, %v2195
  %2546 = vst [vmem:[%s5 + $0x2c0] sm:$0xff] %v2199
  %2547 = vst.msk [vmem:[%s5 + $0x2c8] sm:$0xff] %vm2458, %v2201
  %2548 = vst [vmem:[%s5 + $0x2d0] sm:$0xff] %v2203
  %2549 = vst.msk [vmem:[%s5 + $0x2d8] sm:$0xff] %vm2458, %v2205
  %2550 = vst [vmem:[%s5 + $0x2e0] sm:$0xff] %v2209
  %2551 = vst.msk [vmem:[%s5 + $0x2e8] sm:$0xff] %vm2458, %v2211
  %2552 = vst [vmem:[%s5 + $0x2f0] sm:$0xff] %v2213
  %2553 = vst.msk [vmem:[%s5 + $0x2f8] sm:$0xff] %vm2458, %v2215
  %2554 = vst [vmem:[%s5 + $0x300] sm:$0xff] %v2219
  %2555 = vst.msk [vmem:[%s5 + $0x308] sm:$0xff] %vm2458, %v2221
  %2556 = vst [vmem:[%s5 + $0x310] sm:$0xff] %v2223
  %2557 = vst.msk [vmem:[%s5 + $0x318] sm:$0xff] %vm2458, %v2225
  %2558 = vst [vmem:[%s5 + $0x320] sm:$0xff] %v2229
  %2559 = vst.msk [vmem:[%s5 + $0x328] sm:$0xff] %vm2458, %v2231
  %2560 = vst [vmem:[%s5 + $0x330] sm:$0xff] %v2233
  %2561 = vst.msk [vmem:[%s5 + $0x338] sm:$0xff] %vm2458, %v2235
  %2562 = vst [vmem:[%s5 + $0x340] sm:$0xff] %v2239
  %2563 = vst.msk [vmem:[%s5 + $0x348] sm:$0xff] %vm2458, %v2241
  %2564 = vst [vmem:[%s5 + $0x350] sm:$0xff] %v2243
  %2565 = vst.msk [vmem:[%s5 + $0x358] sm:$0xff] %vm2458, %v2245
  %2566 = vst [vmem:[%s5 + $0x360] sm:$0xff] %v2249
  %2567 = vst.msk [vmem:[%s5 + $0x368] sm:$0xff] %vm2458, %v2251
  %2568 = vst [vmem:[%s5 + $0x370] sm:$0xff] %v2253
  %2569 = vst.msk [vmem:[%s5 + $0x378] sm:$0xff] %vm2458, %v2255
  %2570 = vst [vmem:[%s5 + $0x380] sm:$0xff] %v2259
  %2571 = vst.msk [vmem:[%s5 + $0x388] sm:$0xff] %vm2458, %v2261
  %2572 = vst [vmem:[%s5 + $0x390] sm:$0xff] %v2263
  %2573 = vst.msk [vmem:[%s5 + $0x398] sm:$0xff] %vm2458, %v2265
  %2574 = vst [vmem:[%s5 + $0x3a0] sm:$0xff] %v2269
  %2575 = vst.msk [vmem:[%s5 + $0x3a8] sm:$0xff] %vm2458, %v2271
  %2576 = vst [vmem:[%s5 + $0x3b0] sm:$0xff] %v2273
  %2577 = vst.msk [vmem:[%s5 + $0x3b8] sm:$0xff] %vm2458, %v2275
  %2578 = vst [vmem:[%s5 + $0x3c0] sm:$0xff] %v2279
  %2579 = vst.msk [vmem:[%s5 + $0x3c8] sm:$0xff] %vm2458, %v2281
  %2580 = vst [vmem:[%s5 + $0x3d0] sm:$0xff] %v2283
  %2581 = vst.msk [vmem:[%s5 + $0x3d8] sm:$0xff] %vm2458, %v2285
  %2582 = vst [vmem:[%s5 + $0x3e0] sm:$0xff] %v2289
  %2583 = vst.msk [vmem:[%s5 + $0x3e8] sm:$0xff] %vm2458, %v2291
  %2584 = vst [vmem:[%s5 + $0x3f0] sm:$0xff] %v2293
  %2585 = vst.msk [vmem:[%s5 + $0x3f8] sm:$0xff] %vm2458, %v2295
  %2586 = vst [vmem:[%s5 + $0x400] sm:$0xff] %v2299
  %2587 = vst.msk [vmem:[%s5 + $0x408] sm:$0xff] %vm2458, %v2301
  %2588 = vst [vmem:[%s5 + $0x410] sm:$0xff] %v2303
  %2589 = vst.msk [vmem:[%s5 + $0x418] sm:$0xff] %vm2458, %v2305
  %2590 = vst [vmem:[%s5 + $0x420] sm:$0xff] %v2309
  %2591 = vst.msk [vmem:[%s5 + $0x428] sm:$0xff] %vm2458, %v2311
  %2592 = vst [vmem:[%s5 + $0x430] sm:$0xff] %v2313
  %2593 = vst.msk [vmem:[%s5 + $0x438] sm:$0xff] %vm2458, %v2315
  %2594 = vst [vmem:[%s5 + $0x440] sm:$0xff] %v2319
  %2595 = vst.msk [vmem:[%s5 + $0x448] sm:$0xff] %vm2458, %v2321
  %2596 = vst [vmem:[%s5 + $0x450] sm:$0xff] %v2323
  %2597 = vst.msk [vmem:[%s5 + $0x458] sm:$0xff] %vm2458, %v2325
  %2598 = vst [vmem:[%s5 + $0x460] sm:$0xff] %v2329
  %2599 = vst.msk [vmem:[%s5 + $0x468] sm:$0xff] %vm2458, %v2331
  %2600 = vst [vmem:[%s5 + $0x470] sm:$0xff] %v2333
  %2601 = vst.msk [vmem:[%s5 + $0x478] sm:$0xff] %vm2458, %v2335
  %2602 = vst [vmem:[%s5 + $0x480] sm:$0xff] %v2339
  %2603 = vst.msk [vmem:[%s5 + $0x488] sm:$0xff] %vm2458, %v2341
  %2604 = vst [vmem:[%s5 + $0x490] sm:$0xff] %v2343
  %2605 = vst.msk [vmem:[%s5 + $0x498] sm:$0xff] %vm2458, %v2345
  %2606 = vst [vmem:[%s5 + $0x4a0] sm:$0xff] %v2349
  %2607 = vst.msk [vmem:[%s5 + $0x4a8] sm:$0xff] %vm2458, %v2351
  %2608 = vst [vmem:[%s5 + $0x4b0] sm:$0xff] %v2353
  %2609 = vst.msk [vmem:[%s5 + $0x4b8] sm:$0xff] %vm2458, %v2355
  %2610 = vst [vmem:[%s5 + $0x4c0] sm:$0xff] %v2359
  %2611 = vst.msk [vmem:[%s5 + $0x4c8] sm:$0xff] %vm2458, %v2361
  %2612 = vst [vmem:[%s5 + $0x4d0] sm:$0xff] %v2363
  %2613 = vst.msk [vmem:[%s5 + $0x4d8] sm:$0xff] %vm2458, %v2365
  %2614 = vst [vmem:[%s5 + $0x4e0] sm:$0xff] %v2369
  %2615 = vst.msk [vmem:[%s5 + $0x4e8] sm:$0xff] %vm2458, %v2371
  %2616 = vst [vmem:[%s5 + $0x4f0] sm:$0xff] %v2373
  %2617 = vst.msk [vmem:[%s5 + $0x4f8] sm:$0xff] %vm2458, %v2375
  %2618 = vst [vmem:[%s5 + $0x500] sm:$0xff] %v2379
  %2619 = vst.msk [vmem:[%s5 + $0x508] sm:$0xff] %vm2458, %v2381
  %2620 = vst [vmem:[%s5 + $0x510] sm:$0xff] %v2383
  %2621 = vst.msk [vmem:[%s5 + $0x518] sm:$0xff] %vm2458, %v2385
  %2622 = vst [vmem:[%s5 + $0x520] sm:$0xff] %v2389
  %2623 = vst.msk [vmem:[%s5 + $0x528] sm:$0xff] %vm2458, %v2391
  %2624 = vst [vmem:[%s5 + $0x530] sm:$0xff] %v2393
  %2625 = vst.msk [vmem:[%s5 + $0x538] sm:$0xff] %vm2458, %v2395
  %2626 = vst [vmem:[%s5 + $0x540] sm:$0xff] %v2399
  %2627 = vst.msk [vmem:[%s5 + $0x548] sm:$0xff] %vm2458, %v2401
  %2628 = vst [vmem:[%s5 + $0x550] sm:$0xff] %v2403
  %2629 = vst.msk [vmem:[%s5 + $0x558] sm:$0xff] %vm2458, %v2405
  %2630 = vst [vmem:[%s5 + $0x560] sm:$0xff] %v2409
  %2631 = vst.msk [vmem:[%s5 + $0x568] sm:$0xff] %vm2458, %v2411
  %2632 = vst [vmem:[%s5 + $0x570] sm:$0xff] %v2413
  %2633 = vst.msk [vmem:[%s5 + $0x578] sm:$0xff] %vm2458, %v2415
  %2634 = vst [vmem:[%s5 + $0x580] sm:$0xff] %v2419
  %2635 = vst.msk [vmem:[%s5 + $0x588] sm:$0xff] %vm2458, %v2421
  %2636 = vst [vmem:[%s5 + $0x590] sm:$0xff] %v2423
  %2637 = vst.msk [vmem:[%s5 + $0x598] sm:$0xff] %vm2458, %v2425
  %2638 = vst [vmem:[%s5 + $0x5a0] sm:$0xff] %v2429
  %2639 = vst.msk [vmem:[%s5 + $0x5a8] sm:$0xff] %vm2458, %v2431
  %2640 = vst [vmem:[%s5 + $0x5b0] sm:$0xff] %v2433
  %2641 = vst.msk [vmem:[%s5 + $0x5b8] sm:$0xff] %vm2458, %v2435
  %2642 = vst [vmem:[%s5 + $0x5c0] sm:$0xff] %v2439
  %2643 = vst.msk [vmem:[%s5 + $0x5c8] sm:$0xff] %vm2458, %v2441
  %2644 = vst [vmem:[%s5 + $0x5d0] sm:$0xff] %v2443
  %2645 = vst.msk [vmem:[%s5 + $0x5d8] sm:$0xff] %vm2458, %v2445
  %2646 = vst [vmem:[%s5 + $0x5e0] sm:$0xff] %v2449
  %2647 = vst.msk [vmem:[%s5 + $0x5e8] sm:$0xff] %vm2458, %v2451
  %2648 = vst [vmem:[%s5 + $0x5f0] sm:$0xff] %v2453
  %2649 = vst.msk [vmem:[%s5 + $0x5f8] sm:$0xff] %vm2458, %v2455
  // Predicated region
  $region22: #{model_forward.1} parent=0 // pred_check
    _
  $region23: #{model_forward.1} parent=0 // pred_check_branch
    %2651 = sbr.rel (0) target = $region25
  $region24: #{model_forward.1} parent=0 // pred_region
    _
  $region25: #{model_forward.1} parent=0 // pred_fallthru
    _
  // Predicated region
  $region26: #{model_forward.1} parent=0 // pred_check
    _
  $region27: #{model_forward.1} parent=0 // pred_check_branch
    %2653 = sbr.rel (0) target = $region29
  $region28: #{model_forward.1} parent=0 // pred_region
    _
  $region29: #{model_forward.1} parent=0 // pred_fallthru
    _

</llo_original>
